<compile_context>
chip_gen: v7x
topology: tpu7x:2x2x1
jax: 0.10.0
libtpu: 0.0.40
codegen_flags: <defaults>
</compile_context>

<pallas_src>
import jax
import jax.numpy as jnp
from jax.experimental import pallas as pl
from jax.experimental.pallas import tpu as pltpu

EPS = 1e-5


def bottleneck_kernel(x_ref, xtop_ref, xbot_ref, w1_ref, w2_ref, w3_ref,
                      b1_ref, b2_ref, b3_ref, out_ref):
    # x_ref: (1, TH, W, C) bf16 row tile; xtop_ref/xbot_ref: (1, 1, W, C) bf16 halo rows.
    # w1: (C, P) bf16, w2: (3, 3P, P) bf16 (dy-major, dx*P+k rows), w3: (P, C4) bf16.
    # b1/b2: (1, P) f32, b3: (1, C4) f32. out_ref: (1, TH, W, C4).
    _, TH, W, C = x_ref.shape
    P = w1_ref.shape[1]
    C4 = out_ref.shape[-1]
    t = pl.program_id(1)
    nt = pl.num_programs(1)

    w1 = w1_ref[...]
    b1 = b1_ref[...]

    # ---- conv1 1x1 (+ folded bn1) + relu: tile + the two 1-row halos ----
    h1 = jnp.maximum(
        jnp.dot(x_ref[0].reshape(TH * W, C), w1,
                preferred_element_type=jnp.float32) + b1, 0.0).reshape(TH, W, P)
    h1_top = jnp.maximum(
        jnp.dot(xtop_ref[0, 0], w1, preferred_element_type=jnp.float32) + b1, 0.0)
    h1_bot = jnp.maximum(
        jnp.dot(xbot_ref[0, 0], w1, preferred_element_type=jnp.float32) + b1, 0.0)
    # Rows outside the image are zeros (SamePad2d zero padding).
    h1_top = jnp.where(t == 0, 0.0, h1_top)
    h1_bot = jnp.where(t == nt - 1, 0.0, h1_bot)

    # ---- conv2 3x3 'same': column-augmented slab + 3 accumulating dots (K = 3P) ----
    h1_all = jnp.concatenate([h1_top[None], h1, h1_bot[None]], axis=0)     # (TH+2, W, P)
    zcol = jnp.zeros((TH + 2, 1, P), jnp.float32)
    h1_pad = jnp.concatenate([zcol, h1_all, zcol], axis=1).astype(jnp.bfloat16)
    col3 = jnp.concatenate(
        [h1_pad[:, 0:W], h1_pad[:, 1:W + 1], h1_pad[:, 2:W + 2]], axis=-1)  # (TH+2, W, 3P)

    h2 = b2_ref[...]                                                        # (1, P) f32
    for dy in range(3):                                                     # static unroll
        h2 = h2 + jnp.dot(col3[dy:dy + TH].reshape(TH * W, 3 * P), w2_ref[dy],
                          preferred_element_type=jnp.float32)
    h2 = jnp.maximum(h2, 0.0)                                               # (TH*W, P)

    # ---- conv3 1x1 (+ folded bn3) + residual add + relu ----
    h3 = jnp.dot(h2.astype(jnp.bfloat16), w3_ref[...],
                 preferred_element_type=jnp.float32) + b3_ref[...]
    res = x_ref[0].reshape(TH * W, C).astype(jnp.float32)                   # C == C4
    out = jnp.maximum(h3 + res, 0.0)
    out_ref[0] = out.reshape(TH, W, C4).astype(out_ref.dtype)


def _fold_bn(w, bn):
    """Fold inference BatchNorm into a conv weight (last axis = out channels) + bias."""
    gamma, beta, mean, var = (t.reshape(-1) for t in bn)
    scale = gamma * jax.lax.rsqrt(var + EPS)
    return w * scale, beta - mean * scale


def bottleneck_pallas(x_nchw, w1, w2, w3, bn1, bn2, bn3, *, row_tile=8,
                      out_dtype=jnp.bfloat16):
    N, C, H, W = x_nchw.shape
    P = w1.shape[1]
    C4 = 4 * P
    assert C == C4, "identity shortcut requires inplanes == 4*planes"
    assert W % 8 == 0, "W must be a multiple of 8 for free (H,W,C)->(HW,C) reshapes"
    TH = min(row_tile, H)
    assert H % TH == 0, "H must be divisible by the row tile"
    nt = H // TH

    # Fold BN, cast weights to bf16 (biases stay f32).
    w1f, b1 = _fold_bn(w1, bn1)
    w2f, b2 = _fold_bn(w2, bn2)
    w3f, b3 = _fold_bn(w3, bn3)
    w1b = w1f.astype(jnp.bfloat16)                      # (C, P)
    w2b = w2f.reshape(3, 3 * P, P).astype(jnp.bfloat16)  # rows ordered dx*P + k per dy
    w3b = w3f.astype(jnp.bfloat16)                      # (P, C4)
    b1r = b1.reshape(1, P).astype(jnp.float32)
    b2r = b2.reshape(1, P).astype(jnp.float32)
    b3r = b3.reshape(1, C4).astype(jnp.float32)

    # NCHW -> NHWC + bf16 (hoist once-per-network in a full backbone).
    xh = jnp.transpose(x_nchw, (0, 2, 3, 1)).astype(jnp.bfloat16)

    out_itemsize = jnp.dtype(out_dtype).itemsize
    flops = 2 * N * H * W * (C * P + 9 * P * P + P * C4)
    bytes_accessed = (2 * N * H * W * C + out_itemsize * N * H * W * C4
                      + 2 * (C * P + 9 * P * P + P * C4) + 4 * (2 * P + C4))

    out_nhwc = pl.pallas_call(
        bottleneck_kernel,
        out_shape=jax.ShapeDtypeStruct((N, H, W, C4), out_dtype),
        grid=(N, nt),
        in_specs=[
            # main row tile
            pl.BlockSpec((1, TH, W, C), lambda n, t: (n, t, 0, 0)),
            # 1-row halos (block size 1 on the row axis => block index == row index);
            # clamped at the image boundary, where the kernel zeroes them anyway.
            pl.BlockSpec((1, 1, W, C),
                         lambda n, t: (n, jnp.maximum(t * TH - 1, 0), 0, 0)),
            pl.BlockSpec((1, 1, W, C),
                         lambda n, t: (n, jnp.minimum((t + 1) * TH, H - 1), 0, 0)),
            # grid-invariant weights / biases
            pl.BlockSpec((C, P), lambda n, t: (0, 0)),
            pl.BlockSpec((3, 3 * P, P), lambda n, t: (0, 0, 0)),
            pl.BlockSpec((P, C4), lambda n, t: (0, 0)),
            pl.BlockSpec((1, P), lambda n, t: (0, 0)),
            pl.BlockSpec((1, P), lambda n, t: (0, 0)),
            pl.BlockSpec((1, C4), lambda n, t: (0, 0)),
        ],
        out_specs=pl.BlockSpec((1, TH, W, C4), lambda n, t: (n, t, 0, 0)),
        compiler_params=pltpu.CompilerParams(
            dimension_semantics=("parallel", "parallel"),
            # shrink row_tile so the working set stays well under the per-generation
            # VMEM (v7x: 64 MiB physical).
            vmem_limit_bytes=64 * 1024 * 1024),
        cost_estimate=pl.CostEstimate(flops=flops, transcendentals=0,
                                      bytes_accessed=bytes_accessed),
    )(xh, xh, xh, w1b, w2b, w3b, b1r, b2r, b3r)

    # Back to NCHW (in a full backbone keep NHWC bf16 between blocks instead).
    return jnp.transpose(out_nhwc, (0, 3, 1, 2))


def bottleneck_ref(x_nchw, w1, w2, w3, bn1, bn2, bn3):
    """Pure-JAX f32 reference (lax convs, unfused BN) for correctness checking."""
    x = jnp.transpose(x_nchw, (0, 2, 3, 1))
    dn = ('NHWC', 'HWIO', 'NHWC')

    def bn(h, p):
        g, b, m, v = (t.reshape(1, 1, 1, -1) for t in p)
        return (h - m) * jax.lax.rsqrt(v + EPS) * g + b

    h = jax.lax.conv_general_dilated(x, w1.reshape(1, 1, *w1.shape), (1, 1),
                                     'VALID', dimension_numbers=dn)
    h = jax.nn.relu(bn(h, bn1))
    h = jax.lax.conv_general_dilated(h, w2, (1, 1), ((1, 1), (1, 1)),
                                     dimension_numbers=dn)
    h = jax.nn.relu(bn(h, bn2))
    h = jax.lax.conv_general_dilated(h, w3.reshape(1, 1, *w3.shape), (1, 1),
                                     'VALID', dimension_numbers=dn)
    out = jax.nn.relu(bn(h, bn3) + x)
    return jnp.transpose(out, (0, 3, 1, 2))


def make_bn_params(key, c):
    k1, k2, k3, k4 = jax.random.split(key, 4)
    gamma = (1.0 + 0.1 * jax.random.normal(k1, (1, c))).astype(jnp.float32)
    beta = (0.1 * jax.random.normal(k2, (1, c))).astype(jnp.float32)
    mean = (0.1 * jax.random.normal(k3, (1, c))).astype(jnp.float32)
    var = (0.5 + 0.2 * jnp.abs(jax.random.normal(k4, (1, c)))).astype(jnp.float32)
    return gamma, beta, mean, var


if __name__ == "__main__":
    N, H, W = 2, 16, 16
    planes = 8
    inplanes = planes * 4   # identity shortcut requires inplanes == 4*planes

    key = jax.random.PRNGKey(0)
    kx, kw1, kw2, kw3, kb1, kb2, kb3 = jax.random.split(key, 7)

    x = jax.random.normal(kx, (N, inplanes, H, W), jnp.float32)
    w1 = 0.1 * jax.random.normal(kw1, (inplanes, planes), jnp.float32)       # 1x1 (Cin, Cout)
    w2 = 0.1 * jax.random.normal(kw2, (3, 3, planes, planes), jnp.float32)   # 3x3 HWIO
    w3 = 0.1 * jax.random.normal(kw3, (planes, 4 * planes), jnp.float32)     # 1x1 (Cin, Cout)
    bn1 = make_bn_params(kb1, planes)
    bn2 = make_bn_params(kb2, planes)
    bn3 = make_bn_params(kb3, 4 * planes)

    out = bottleneck_pallas(x, w1, w2, w3, bn1, bn2, bn3, row_tile=8)
    out = jax.block_until_ready(out)

    ref = jax.block_until_ready(bottleneck_ref(x, w1, w2, w3, bn1, bn2, bn3))
    assert out.shape == (N, 4 * planes, H, W)
    # bf16 activations/weights/outputs vs f32 reference -> loose-but-meaningful tolerance.
    err = jnp.max(jnp.abs(out.astype(jnp.float32) - ref))
    assert jnp.allclose(out.astype(jnp.float32), ref, atol=6e-2, rtol=6e-2), \
        f"max abs err = {err}"

    print("KERNEL_OK")
</pallas_src>

<mosaic_0001>
module attributes {stable_mosaic.version = 11 : i64} {
  func.func @bottleneck_kernel(%arg0: i32, %arg1: i32, %arg2: memref<1x8x16x32xbf16, #tpu.memory_space<vmem>>, %arg3: memref<1x1x16x32xbf16, #tpu.memory_space<vmem>>, %arg4: memref<1x1x16x32xbf16, #tpu.memory_space<vmem>>, %arg5: memref<32x8xbf16, #tpu.memory_space<vmem>>, %arg6: memref<3x24x8xbf16, #tpu.memory_space<vmem>>, %arg7: memref<8x32xbf16, #tpu.memory_space<vmem>>, %arg8: memref<1x8xf32, #tpu.memory_space<vmem>>, %arg9: memref<1x8xf32, #tpu.memory_space<vmem>>, %arg10: memref<1x32xf32, #tpu.memory_space<vmem>>, %arg11: memref<1x8x16x32xbf16, #tpu.memory_space<vmem>>) attributes {dimension_semantics = [#tpu.dimension_semantics<parallel>, #tpu.dimension_semantics<parallel>], iteration_bounds = array<i64: 2, 2>, scalar_prefetch = 0 : i64, scratch_operands = 0 : i64, tpu.core_type = #tpu.core_type<tc>, window_params = [{transform_indices = @transform_0, window_bounds = array<i64: 1, 8, 16, 32>}, {transform_indices = @transform_1, window_bounds = array<i64: 1, 1, 16, 32>}, {transform_indices = @transform_2, window_bounds = array<i64: 1, 1, 16, 32>}, {pipeline_mode = #tpu.pipeline_mode<synchronous>, transform_indices = @transform_3, window_bounds = array<i64: 32, 8>}, {pipeline_mode = #tpu.pipeline_mode<synchronous>, transform_indices = @transform_4, window_bounds = array<i64: 3, 24, 8>}, {pipeline_mode = #tpu.pipeline_mode<synchronous>, transform_indices = @transform_5, window_bounds = array<i64: 8, 32>}, {pipeline_mode = #tpu.pipeline_mode<synchronous>, transform_indices = @transform_6, window_bounds = array<i64: 1, 8>}, {pipeline_mode = #tpu.pipeline_mode<synchronous>, transform_indices = @transform_7, window_bounds = array<i64: 1, 8>}, {pipeline_mode = #tpu.pipeline_mode<synchronous>, transform_indices = @transform_8, window_bounds = array<i64: 1, 32>}, {transform_indices = @transform_9, window_bounds = array<i64: 1, 8, 16, 32>}]} {
    %c0 = arith.constant 0 : index
    %c0_0 = arith.constant 0 : index
    %0 = vector.load %arg5[%c0, %c0_0] : memref<32x8xbf16, #tpu.memory_space<vmem>>, vector<32x8xbf16>
    %c0_1 = arith.constant 0 : index
    %c0_2 = arith.constant 0 : index
    %1 = vector.load %arg8[%c0_1, %c0_2] : memref<1x8xf32, #tpu.memory_space<vmem>>, vector<1x8xf32>
    %c0_3 = arith.constant 0 : index
    %c0_4 = arith.constant 0 : index
    %c0_5 = arith.constant 0 : index
    %c0_6 = arith.constant 0 : index
    %2 = vector.load %arg2[%c0_3, %c0_4, %c0_5, %c0_6] : memref<1x8x16x32xbf16, #tpu.memory_space<vmem>>, vector<1x8x16x32xbf16>
    %3 = vector.shape_cast %2 : vector<1x8x16x32xbf16> to vector<8x16x32xbf16>
    %4 = vector.shape_cast %3 : vector<8x16x32xbf16> to vector<128x32xbf16>
    %cst = arith.constant dense<0.000000e+00> : vector<128x8xf32>
    %5 = tpu.matmul %4, %0, %cst {dimension_numbers = #tpu.dot_dimension_numbers<[1], [0], [0], [1], [0, 0, 1, 1], [], []>} : vector<128x32xbf16>, vector<32x8xbf16>, vector<128x8xf32> -> vector<128x8xf32>
    %6 = vector.broadcast %1 : vector<1x8xf32> to vector<128x8xf32>
    %7 = arith.addf %5, %6 : vector<128x8xf32>
    %cst_7 = arith.constant 0.000000e+00 : f32
    %8 = vector.broadcast %cst_7 : f32 to vector<128x8xf32>
    %9 = arith.maximumf %7, %8 : vector<128x8xf32>
    %10 = vector.shape_cast %9 : vector<128x8xf32> to vector<8x16x8xf32>
    %c0_8 = arith.constant 0 : index
    %c0_9 = arith.constant 0 : index
    %c0_10 = arith.constant 0 : index
    %c0_11 = arith.constant 0 : index
    %11 = vector.load %arg3[%c0_8, %c0_9, %c0_10, %c0_11] : memref<1x1x16x32xbf16, #tpu.memory_space<vmem>>, vector<1x1x16x32xbf16>
    %12 = vector.shape_cast %11 : vector<1x1x16x32xbf16> to vector<16x32xbf16>
    %cst_12 = arith.constant dense<0.000000e+00> : vector<16x8xf32>
    %13 = tpu.matmul %12, %0, %cst_12 {dimension_numbers = #tpu.dot_dimension_numbers<[1], [0], [0], [1], [0, 0, 1, 1], [], []>} : vector<16x32xbf16>, vector<32x8xbf16>, vector<16x8xf32> -> vector<16x8xf32>
    %14 = vector.broadcast %1 : vector<1x8xf32> to vector<16x8xf32>
    %15 = arith.addf %13, %14 : vector<16x8xf32>
    %cst_13 = arith.constant 0.000000e+00 : f32
    %16 = vector.broadcast %cst_13 : f32 to vector<16x8xf32>
    %17 = arith.maximumf %15, %16 : vector<16x8xf32>
    %c0_14 = arith.constant 0 : index
    %c0_15 = arith.constant 0 : index
    %c0_16 = arith.constant 0 : index
    %c0_17 = arith.constant 0 : index
    %18 = vector.load %arg4[%c0_14, %c0_15, %c0_16, %c0_17] : memref<1x1x16x32xbf16, #tpu.memory_space<vmem>>, vector<1x1x16x32xbf16>
    %19 = vector.shape_cast %18 : vector<1x1x16x32xbf16> to vector<16x32xbf16>
    %cst_18 = arith.constant dense<0.000000e+00> : vector<16x8xf32>
    %20 = tpu.matmul %19, %0, %cst_18 {dimension_numbers = #tpu.dot_dimension_numbers<[1], [0], [0], [1], [0, 0, 1, 1], [], []>} : vector<16x32xbf16>, vector<32x8xbf16>, vector<16x8xf32> -> vector<16x8xf32>
    %21 = vector.broadcast %1 : vector<1x8xf32> to vector<16x8xf32>
    %22 = arith.addf %20, %21 : vector<16x8xf32>
    %cst_19 = arith.constant 0.000000e+00 : f32
    %23 = vector.broadcast %cst_19 : f32 to vector<16x8xf32>
    %24 = arith.maximumf %22, %23 : vector<16x8xf32>
    %c0_i32 = arith.constant 0 : i32
    %25 = arith.cmpi eq, %arg1, %c0_i32 : i32
    %cst_20 = arith.constant 0.000000e+00 : f32
    %26 = vector.broadcast %cst_20 : f32 to vector<16x8xf32>
    %27 = arith.select %25, %26, %17 : vector<16x8xf32>
    %c1_i32 = arith.constant 1 : i32
    %28 = arith.cmpi eq, %arg1, %c1_i32 : i32
    %cst_21 = arith.constant 0.000000e+00 : f32
    %29 = vector.broadcast %cst_21 : f32 to vector<16x8xf32>
    %30 = arith.select %28, %29, %24 : vector<16x8xf32>
    %31 = vector.shape_cast %27 : vector<16x8xf32> to vector<1x16x8xf32>
    %32 = vector.shape_cast %30 : vector<16x8xf32> to vector<1x16x8xf32>
    %33 = tpu.concatenate %31, %10, %32 in 0 : vector<1x16x8xf32>, vector<8x16x8xf32>, vector<1x16x8xf32> -> vector<10x16x8xf32>
    %cst_22 = arith.constant 0.000000e+00 : f32
    %34 = vector.broadcast %cst_22 : f32 to vector<10x1x8xf32>
    %35 = tpu.concatenate %34, %33, %34 in 1 : vector<10x1x8xf32>, vector<10x16x8xf32>, vector<10x1x8xf32> -> vector<10x18x8xf32>
    %36 = arith.truncf %35 : vector<10x18x8xf32> to vector<10x18x8xbf16>
    %37 = vector.extract_strided_slice %36 {offsets = [0, 0, 0], sizes = [10, 16, 8], strides = [1, 1, 1]} : vector<10x18x8xbf16> to vector<10x16x8xbf16>
    %38 = vector.extract_strided_slice %36 {offsets = [0, 1, 0], sizes = [10, 16, 8], strides = [1, 1, 1]} : vector<10x18x8xbf16> to vector<10x16x8xbf16>
    %39 = vector.extract_strided_slice %36 {offsets = [0, 2, 0], sizes = [10, 16, 8], strides = [1, 1, 1]} : vector<10x18x8xbf16> to vector<10x16x8xbf16>
    %40 = tpu.concatenate %37, %38, %39 in 2 : vector<10x16x8xbf16>, vector<10x16x8xbf16>, vector<10x16x8xbf16> -> vector<10x16x24xbf16>
    %c0_23 = arith.constant 0 : index
    %c0_24 = arith.constant 0 : index
    %41 = vector.load %arg9[%c0_23, %c0_24] : memref<1x8xf32, #tpu.memory_space<vmem>>, vector<1x8xf32>
    %42 = vector.extract_strided_slice %40 {offsets = [0, 0, 0], sizes = [8, 16, 24], strides = [1, 1, 1]} : vector<10x16x24xbf16> to vector<8x16x24xbf16>
    %43 = vector.shape_cast %42 : vector<8x16x24xbf16> to vector<128x24xbf16>
    %c0_25 = arith.constant 0 : index
    %c0_26 = arith.constant 0 : index
    %c0_27 = arith.constant 0 : index
    %44 = vector.load %arg6[%c0_25, %c0_26, %c0_27] : memref<3x24x8xbf16, #tpu.memory_space<vmem>>, vector<1x24x8xbf16>
    %45 = vector.shape_cast %44 : vector<1x24x8xbf16> to vector<24x8xbf16>
    %cst_28 = arith.constant dense<0.000000e+00> : vector<128x8xf32>
    %46 = tpu.matmul %43, %45, %cst_28 {dimension_numbers = #tpu.dot_dimension_numbers<[1], [0], [0], [1], [0, 0, 1, 1], [], []>} : vector<128x24xbf16>, vector<24x8xbf16>, vector<128x8xf32> -> vector<128x8xf32>
    %47 = vector.broadcast %41 : vector<1x8xf32> to vector<128x8xf32>
    %48 = arith.addf %47, %46 : vector<128x8xf32>
    %49 = vector.extract_strided_slice %40 {offsets = [1, 0, 0], sizes = [8, 16, 24], strides = [1, 1, 1]} : vector<10x16x24xbf16> to vector<8x16x24xbf16>
    %50 = vector.shape_cast %49 : vector<8x16x24xbf16> to vector<128x24xbf16>
    %c1 = arith.constant 1 : index
    %c0_29 = arith.constant 0 : index
    %c0_30 = arith.constant 0 : index
    %51 = vector.load %arg6[%c1, %c0_29, %c0_30] : memref<3x24x8xbf16, #tpu.memory_space<vmem>>, vector<1x24x8xbf16>
    %52 = vector.shape_cast %51 : vector<1x24x8xbf16> to vector<24x8xbf16>
    %cst_31 = arith.constant dense<0.000000e+00> : vector<128x8xf32>
    %53 = tpu.matmul %50, %52, %cst_31 {dimension_numbers = #tpu.dot_dimension_numbers<[1], [0], [0], [1], [0, 0, 1, 1], [], []>} : vector<128x24xbf16>, vector<24x8xbf16>, vector<128x8xf32> -> vector<128x8xf32>
    %54 = arith.addf %48, %53 : vector<128x8xf32>
    %55 = vector.extract_strided_slice %40 {offsets = [2, 0, 0], sizes = [8, 16, 24], strides = [1, 1, 1]} : vector<10x16x24xbf16> to vector<8x16x24xbf16>
    %56 = vector.shape_cast %55 : vector<8x16x24xbf16> to vector<128x24xbf16>
    %c2 = arith.constant 2 : index
    %c0_32 = arith.constant 0 : index
    %c0_33 = arith.constant 0 : index
    %57 = vector.load %arg6[%c2, %c0_32, %c0_33] : memref<3x24x8xbf16, #tpu.memory_space<vmem>>, vector<1x24x8xbf16>
    %58 = vector.shape_cast %57 : vector<1x24x8xbf16> to vector<24x8xbf16>
    %cst_34 = arith.constant dense<0.000000e+00> : vector<128x8xf32>
    %59 = tpu.matmul %56, %58, %cst_34 {dimension_numbers = #tpu.dot_dimension_numbers<[1], [0], [0], [1], [0, 0, 1, 1], [], []>} : vector<128x24xbf16>, vector<24x8xbf16>, vector<128x8xf32> -> vector<128x8xf32>
    %60 = arith.addf %54, %59 : vector<128x8xf32>
    %cst_35 = arith.constant 0.000000e+00 : f32
    %61 = vector.broadcast %cst_35 : f32 to vector<128x8xf32>
    %62 = arith.maximumf %60, %61 : vector<128x8xf32>
    %63 = arith.truncf %62 : vector<128x8xf32> to vector<128x8xbf16>
    %c0_36 = arith.constant 0 : index
    %c0_37 = arith.constant 0 : index
    %64 = vector.load %arg7[%c0_36, %c0_37] : memref<8x32xbf16, #tpu.memory_space<vmem>>, vector<8x32xbf16>
    %cst_38 = arith.constant dense<0.000000e+00> : vector<128x32xf32>
    %65 = tpu.matmul %63, %64, %cst_38 {dimension_numbers = #tpu.dot_dimension_numbers<[1], [0], [0], [1], [0, 0, 1, 1], [], []>} : vector<128x8xbf16>, vector<8x32xbf16>, vector<128x32xf32> -> vector<128x32xf32>
    %c0_39 = arith.constant 0 : index
    %c0_40 = arith.constant 0 : index
    %66 = vector.load %arg10[%c0_39, %c0_40] : memref<1x32xf32, #tpu.memory_space<vmem>>, vector<1x32xf32>
    %67 = vector.broadcast %66 : vector<1x32xf32> to vector<128x32xf32>
    %68 = arith.addf %65, %67 : vector<128x32xf32>
    %c0_41 = arith.constant 0 : index
    %c0_42 = arith.constant 0 : index
    %c0_43 = arith.constant 0 : index
    %c0_44 = arith.constant 0 : index
    %69 = vector.load %arg2[%c0_41, %c0_42, %c0_43, %c0_44] : memref<1x8x16x32xbf16, #tpu.memory_space<vmem>>, vector<1x8x16x32xbf16>
    %70 = vector.shape_cast %69 : vector<1x8x16x32xbf16> to vector<8x16x32xbf16>
    %71 = vector.shape_cast %70 : vector<8x16x32xbf16> to vector<128x32xbf16>
    %72 = arith.extf %71 : vector<128x32xbf16> to vector<128x32xf32>
    %73 = arith.addf %68, %72 : vector<128x32xf32>
    %cst_45 = arith.constant 0.000000e+00 : f32
    %74 = vector.broadcast %cst_45 : f32 to vector<128x32xf32>
    %75 = arith.maximumf %73, %74 : vector<128x32xf32>
    %76 = vector.shape_cast %75 : vector<128x32xf32> to vector<8x16x32xf32>
    %77 = arith.truncf %76 : vector<8x16x32xf32> to vector<8x16x32xbf16>
    %c0_46 = arith.constant 0 : index
    %c0_47 = arith.constant 0 : index
    %c0_48 = arith.constant 0 : index
    %c0_49 = arith.constant 0 : index
    %78 = vector.load %arg11[%c0_46, %c0_47, %c0_48, %c0_49] : memref<1x8x16x32xbf16, #tpu.memory_space<vmem>>, vector<1x8x16x32xbf16>
    %79 = vector.shape_cast %78 : vector<1x8x16x32xbf16> to vector<8x16x32xbf16>
    %80 = vector.shape_cast %77 : vector<8x16x32xbf16> to vector<1x8x16x32xbf16>
    tpu.vector_store %arg11[%c0_46, %c0_47, %c0_48, %c0_49], %80 {strides = array<i32>} : memref<1x8x16x32xbf16, #tpu.memory_space<vmem>>, vector<1x8x16x32xbf16>,
    return
  }
  func.func @transform_0(%arg0: i32, %arg1: i32) -> (i32, i32, i32, i32) {
    %c0_i32 = arith.constant 0 : i32
    %c0_i32_0 = arith.constant 0 : i32
    %c0_i32_1 = arith.constant 0 : i32
    return %arg0, %arg1, %c0_i32, %c0_i32_0 : i32, i32, i32, i32
  }
  func.func @transform_1(%arg0: i32, %arg1: i32) -> (i32, i32, i32, i32) {
    %c8_i32 = arith.constant 8 : i32
    %0 = arith.muli %arg1, %c8_i32 : i32
    %c1_i32 = arith.constant 1 : i32
    %1 = arith.subi %0, %c1_i32 : i32
    %c0_i32 = arith.constant 0 : i32
    %2 = arith.maxsi %1, %c0_i32 : i32
    %c0_i32_0 = arith.constant 0 : i32
    %c0_i32_1 = arith.constant 0 : i32
    %c0_i32_2 = arith.constant 0 : i32
    return %arg0, %2, %c0_i32_0, %c0_i32_1 : i32, i32, i32, i32
  }
  func.func @transform_2(%arg0: i32, %arg1: i32) -> (i32, i32, i32, i32) {
    %c1_i32 = arith.constant 1 : i32
    %0 = arith.addi %arg1, %c1_i32 : i32
    %c8_i32 = arith.constant 8 : i32
    %1 = arith.muli %0, %c8_i32 : i32
    %c15_i32 = arith.constant 15 : i32
    %2 = arith.minsi %1, %c15_i32 : i32
    %c0_i32 = arith.constant 0 : i32
    %c0_i32_0 = arith.constant 0 : i32
    %c0_i32_1 = arith.constant 0 : i32
    return %arg0, %2, %c0_i32, %c0_i32_0 : i32, i32, i32, i32
  }
  func.func @transform_3(%arg0: i32, %arg1: i32) -> (i32, i32) {
    %c0_i32 = arith.constant 0 : i32
    %c0_i32_0 = arith.constant 0 : i32
    %c0_i32_1 = arith.constant 0 : i32
    return %c0_i32, %c0_i32_0 : i32, i32
  }
  func.func @transform_4(%arg0: i32, %arg1: i32) -> (i32, i32, i32) {
    %c0_i32 = arith.constant 0 : i32
    %c0_i32_0 = arith.constant 0 : i32
    %c0_i32_1 = arith.constant 0 : i32
    %c0_i32_2 = arith.constant 0 : i32
    return %c0_i32, %c0_i32_0, %c0_i32_1 : i32, i32, i32
  }
  func.func @transform_5(%arg0: i32, %arg1: i32) -> (i32, i32) {
    %c0_i32 = arith.constant 0 : i32
    %c0_i32_0 = arith.constant 0 : i32
    %c0_i32_1 = arith.constant 0 : i32
    return %c0_i32, %c0_i32_0 : i32, i32
  }
  func.func @transform_6(%arg0: i32, %arg1: i32) -> (i32, i32) {
    %c0_i32 = arith.constant 0 : i32
    %c0_i32_0 = arith.constant 0 : i32
    %c0_i32_1 = arith.constant 0 : i32
    return %c0_i32, %c0_i32_0 : i32, i32
  }
  func.func @transform_7(%arg0: i32, %arg1: i32) -> (i32, i32) {
    %c0_i32 = arith.constant 0 : i32
    %c0_i32_0 = arith.constant 0 : i32
    %c0_i32_1 = arith.constant 0 : i32
    return %c0_i32, %c0_i32_0 : i32, i32
  }
  func.func @transform_8(%arg0: i32, %arg1: i32) -> (i32, i32) {
    %c0_i32 = arith.constant 0 : i32
    %c0_i32_0 = arith.constant 0 : i32
    %c0_i32_1 = arith.constant 0 : i32
    return %c0_i32, %c0_i32_0 : i32, i32
  }
  func.func @transform_9(%arg0: i32, %arg1: i32) -> (i32, i32, i32, i32) {
    %c0_i32 = arith.constant 0 : i32
    %c0_i32_0 = arith.constant 0 : i32
    %c0_i32_1 = arith.constant 0 : i32
    return %arg0, %arg1, %c0_i32, %c0_i32_0 : i32, i32, i32, i32
  }
}

</mosaic_0001>

<llo_original>
// kernel: tpu_custom_call.1
$region0: #{tpu_custom_call.1}
  #allocation0 [shape = 'u32[]', space=smem, size = 0x4, offset = 0x4, fixed_abs, tag = 'smem constant byte address 0x4 - core index']
  #allocation1 [shape = 'u32[144,128]{1,0:T(1,128)}', space=vmem, size = 0x12000, scoped, tag = 'internal scratch']
  %s0 = inlined_call_operand.hbm [shape: bf16[2,16,16,32], index: 0, kind: input, shape index: {}]
  %s1 = inlined_call_operand.hbm [shape: bf16[2,16,16,32], index: 1, kind: input, shape index: {}]
  %s2 = inlined_call_operand.hbm [shape: bf16[2,16,16,32], index: 2, kind: input, shape index: {}]
  %s3 = inlined_call_operand.hbm [shape: bf16[32,8], index: 3, kind: input, shape index: {}]
  %s4 = inlined_call_operand.hbm [shape: bf16[3,24,8], index: 4, kind: input, shape index: {}]
  %s5 = inlined_call_operand.hbm [shape: bf16[8,32], index: 5, kind: input, shape index: {}]
  %s6 = inlined_call_operand.hbm [shape: f32[1,8], index: 6, kind: input, shape index: {}]
  %s7 = inlined_call_operand.hbm [shape: f32[1,8], index: 7, kind: input, shape index: {}]
  %s8 = inlined_call_operand.hbm [shape: f32[1,32], index: 8, kind: input, shape index: {}]
  %s9 = inlined_call_operand.hbm [shape: bf16[2,16,16,32], index: 9, kind: output, shape index: {}]
  %s10 = sld [smem:[#allocation0]]
  $region105: #{tpu_custom_call.1} parent=0
    _
  %s12 = ssub.s32 1, %s10
  %s13 = scalar_select 0, %s12, %s10
  $region1: #{tpu_custom_call.1} parent=0
    #allocation2 [shape = 'u8[65536]{0}', space=vmem, size = 0x10000, scoped, tag = 'input window, operand 0']
    #allocation3 [shape = 's32[2]{0}', space=sflag, size = 0x8, scoped, tag = 'scoped memory for tpu_custom_call.1']
    #allocation4 [shape = 's32[2]{0}', space=sflag, size = 0x8, scoped, tag = 'scoped memory for tpu_custom_call.1']
    #allocation5 [shape = 'u8[8192]{0}', space=vmem, size = 0x2000, scoped, tag = 'input window, operand 1']
    #allocation6 [shape = 's32[2]{0}', space=sflag, size = 0x8, scoped, tag = 'scoped memory for tpu_custom_call.1']
    #allocation7 [shape = 'u8[8192]{0}', space=vmem, size = 0x2000, scoped, tag = 'input window, operand 2']
    #allocation8 [shape = 'u8[8192]{0}', space=vmem, size = 0x2000, scoped, tag = 'input window, operand 3, single buffered']
    #allocation9 [shape = 's32[1]{0}', space=sflag, size = 0x4, scoped, tag = 'scoped memory for tpu_custom_call.1']
    #allocation10 [shape = 'u8[18432]{0}', space=vmem, size = 0x4800, scoped, tag = 'input window, operand 4, single buffered']
    #allocation11 [shape = 'u8[2048]{0}', space=vmem, size = 0x800, scoped, tag = 'input window, operand 5, single buffered']
    #allocation12 [shape = 's32[1]{0}', space=sflag, size = 0x4, scoped, tag = 'scoped memory for tpu_custom_call.1']
    #allocation13 [shape = 'u8[512]{0}', space=vmem, size = 0x400, scoped, tag = 'input window, operand 6, single buffered']
    #allocation14 [shape = 'u8[512]{0}', space=vmem, size = 0x400, scoped, tag = 'input window, operand 7, single buffered']
    #allocation15 [shape = 's32[1]{0}', space=sflag, size = 0x4, scoped, tag = 'scoped memory for tpu_custom_call.1']
    #allocation16 [shape = 'u8[512]{0}', space=vmem, size = 0x400, scoped, tag = 'input window, operand 8, single buffered']
    #allocation17 [shape = 'u8[65536]{0}', space=vmem, size = 0x10000, scoped, tag = 'output window, operand 0']
    %14 = vsyncpa [#allocation3], 0
    %s15 = scalar_lea.sflag [#allocation3], 1
    %16 = vsyncpa %s15, 0
    %17 = vsyncpa [#allocation6], 0
    %s18 = scalar_lea.sflag [#allocation6], 1
    %19 = vsyncpa %s18, 0
    %20 = vsyncpa [#allocation9], 0
    %21 = vsyncpa [#allocation12], 0
    %22 = vsyncpa [#allocation15], 0
    %23 = vsyncpa [#allocation4], 0
    %s24 = scalar_lea.sflag [#allocation4], 1
    %25 = vsyncpa %s24, 0
    loop: start=0, step=1, limit=6
    $region2: #{tpu_custom_call.1} parent=1 // loop_pre_header
      _
    $region3: #{tpu_custom_call.1} parent=1 // loop_header
      %s27 = sphi 0, %s31
      %p28 = scmp.ge.s32.totalorder %s27, 6
      %s34 = sphi 0, %s46
      %s35 = sphi 0, %s42
      %s36 = sphi 0, %s34
      %s37 = sphi 0, %s35
      %s38 = sphi 0, %s36
      %s39 = sphi 0, %s37
      %s51 = sphi 0, %s53
      %s54 = sphi 0, %s51
      %s55 = sphi 0, %s54
      %s71 = sphi 0, %s55
      %s87 = sphi 0, %s89
      %s90 = sphi 0, %s87
      %s91 = sphi 0, %s90
      %s107 = sphi 0, %s91
      %s123 = sphi 0, %s125
      %s126 = sphi 0, %s123
      %s127 = sphi 0, %s126
      %s143 = sphi 0, %s127
      %s147 = sphi 0, %s147
      %s149 = sphi 0, %s147
      %s150 = sphi 0, %s149
      %s164 = sphi 0, %s150
      %s168 = sphi 0, %s168
      %s170 = sphi 0, %s168
      %s171 = sphi 0, %s170
      %s185 = sphi 0, %s171
      %s189 = sphi 0, %s189
      %s191 = sphi 0, %s189
      %s192 = sphi 0, %s191
      %s206 = sphi 0, %s192
      %s210 = sphi 0, %s210
      %s212 = sphi 0, %s210
      %s213 = sphi 0, %s212
      %s227 = sphi 0, %s213
      %s231 = sphi 0, %s231
      %s233 = sphi 0, %s231
      %s234 = sphi 0, %s233
      %s248 = sphi 0, %s234
      %s252 = sphi 0, %s252
      %s254 = sphi 0, %s252
      %s255 = sphi 0, %s254
      %s269 = sphi 0, %s255
      %s277 = sphi 0, %s279
      %s280 = sphi 0, %s277
      %s281 = sphi 0, %s280
      %s297 = sphi 0, %s281
    $region4: #{tpu_custom_call.1} parent=1 // loop_header_branch
      %30 = sbr.rel (%p28) target = $region8
    $region5: #{tpu_custom_call.1} parent=1 // loop_body
      %s32 = ssub.s32 %s27, 1
      %s33 = ssub.s32 %s27, 2
      %s40 = sadd.s32 1, %s35
      %p41 = scmp.ge.s32.totalorder %s40, 2
      %s42 = scalar_select %p41, 0, %s40
      %s43 = sadd.s32 1, %s34
      %s44 = scalar_select %p41, %s43, %s34
      %p45 = scmp.ge.s32.totalorder %s44, 2
      %s46 = scalar_select %p45, 0, %s44
      %s47 = ssub.s32 %s34, %s46
      %s48 = ssub.s32 %s35, %s42
      %s49 = sor.u32 %s47, %s48
      %p50 = scmp.eq.s32.totalorder %s49, 0
      %s52 = sadd.s32 %s51, 1
      %s53 = scalar_select %p50, %s51, %s52
      %p56 = pneg %p50
      %p57 = scmp.eq.s32.totalorder %s27, 3
      %p58 = por %p56, %p57
      %p59 = scmp.ne.s32.totalorder %s51, %s54
      %p60 = scmp.eq.s32.totalorder %s27, 0
      %p61 = por %p59, %p60
      %p62 = scmp.ne.s32.totalorder %s51, %s54
      %p63 = scmp.eq.s32.totalorder %s32, 3
      %p64 = por %p62, %p63
      %p65 = scmp.ne.s32.totalorder %s54, %s55
      %p66 = scmp.eq.s32.totalorder %s32, 0
      %p67 = por %p65, %p66
      %p68 = scmp.ne.s32.totalorder %s54, %s55
      %p69 = scmp.eq.s32.totalorder %s33, 3
      %p70 = por %p68, %p69
      %p72 = scmp.ne.s32.totalorder %s55, %s71
      %p73 = scmp.eq.s32.totalorder %s33, 0
      %p74 = por %p72, %p73
      %s75 = smul.u32 %s35, 8
      %s76 = ssub.s32 %s75, 1
      %p77 = scmp.gt.s32.totalorder %s76, 0
      %s78 = scalar_select %p77, %s76, 0
      %s79 = smul.u32 %s42, 8
      %s80 = ssub.s32 %s79, 1
      %p81 = scmp.gt.s32.totalorder %s80, 0
      %s82 = scalar_select %p81, %s80, 0
      %s83 = ssub.s32 %s34, %s46
      %s84 = ssub.s32 %s78, %s82
      %s85 = sor.u32 %s83, %s84
      %p86 = scmp.eq.s32.totalorder %s85, 0
      %s88 = sadd.s32 %s87, 1
      %s89 = scalar_select %p86, %s87, %s88
      %p92 = pneg %p86
      %p93 = scmp.eq.s32.totalorder %s27, 3
      %p94 = por %p92, %p93
      %p95 = scmp.ne.s32.totalorder %s87, %s90
      %p96 = scmp.eq.s32.totalorder %s27, 0
      %p97 = por %p95, %p96
      %p98 = scmp.ne.s32.totalorder %s87, %s90
      %p99 = scmp.eq.s32.totalorder %s32, 3
      %p100 = por %p98, %p99
      %p101 = scmp.ne.s32.totalorder %s90, %s91
      %p102 = scmp.eq.s32.totalorder %s32, 0
      %p103 = por %p101, %p102
      %p104 = scmp.ne.s32.totalorder %s90, %s91
      %p105 = scmp.eq.s32.totalorder %s33, 3
      %p106 = por %p104, %p105
      %p108 = scmp.ne.s32.totalorder %s91, %s107
      %p109 = scmp.eq.s32.totalorder %s33, 0
      %p110 = por %p108, %p109
      %s111 = sadd.s32 %s35, 1
      %s112 = smul.u32 %s111, 8
      %p113 = scmp.lt.s32.totalorder %s112, 15
      %s114 = scalar_select %p113, %s112, 15
      %s115 = sadd.s32 %s42, 1
      %s116 = smul.u32 %s115, 8
      %p117 = scmp.lt.s32.totalorder %s116, 15
      %s118 = scalar_select %p117, %s116, 15
      %s119 = ssub.s32 %s34, %s46
      %s120 = ssub.s32 %s114, %s118
      %s121 = sor.u32 %s119, %s120
      %p122 = scmp.eq.s32.totalorder %s121, 0
      %s124 = sadd.s32 %s123, 1
      %s125 = scalar_select %p122, %s123, %s124
      %p128 = pneg %p122
      %p129 = scmp.eq.s32.totalorder %s27, 3
      %p130 = por %p128, %p129
      %p131 = scmp.ne.s32.totalorder %s123, %s126
      %p132 = scmp.eq.s32.totalorder %s27, 0
      %p133 = por %p131, %p132
      %p134 = scmp.ne.s32.totalorder %s123, %s126
      %p135 = scmp.eq.s32.totalorder %s32, 3
      %p136 = por %p134, %p135
      %p137 = scmp.ne.s32.totalorder %s126, %s127
      %p138 = scmp.eq.s32.totalorder %s32, 0
      %p139 = por %p137, %p138
      %p140 = scmp.ne.s32.totalorder %s126, %s127
      %p141 = scmp.eq.s32.totalorder %s33, 3
      %p142 = por %p140, %p141
      %p144 = scmp.ne.s32.totalorder %s127, %s143
      %p145 = scmp.eq.s32.totalorder %s33, 0
      %p146 = por %p144, %p145
      %s148 = sadd.s32 %s147, 1
      %p151 = scmp.eq.s32.totalorder %s27, 3
      %p152 = scmp.ne.s32.totalorder %s147, %s149
      %p153 = scmp.eq.s32.totalorder %s27, 0
      %p154 = por %p152, %p153
      %p155 = scmp.ne.s32.totalorder %s147, %s149
      %p156 = scmp.eq.s32.totalorder %s32, 3
      %p157 = por %p155, %p156
      %p158 = scmp.ne.s32.totalorder %s149, %s150
      %p159 = scmp.eq.s32.totalorder %s32, 0
      %p160 = por %p158, %p159
      %p161 = scmp.ne.s32.totalorder %s149, %s150
      %p162 = scmp.eq.s32.totalorder %s33, 3
      %p163 = por %p161, %p162
      %p165 = scmp.ne.s32.totalorder %s150, %s164
      %p166 = scmp.eq.s32.totalorder %s33, 0
      %p167 = por %p165, %p166
      %s169 = sadd.s32 %s168, 1
      %p172 = scmp.eq.s32.totalorder %s27, 3
      %p173 = scmp.ne.s32.totalorder %s168, %s170
      %p174 = scmp.eq.s32.totalorder %s27, 0
      %p175 = por %p173, %p174
      %p176 = scmp.ne.s32.totalorder %s168, %s170
      %p177 = scmp.eq.s32.totalorder %s32, 3
      %p178 = por %p176, %p177
      %p179 = scmp.ne.s32.totalorder %s170, %s171
      %p180 = scmp.eq.s32.totalorder %s32, 0
      %p181 = por %p179, %p180
      %p182 = scmp.ne.s32.totalorder %s170, %s171
      %p183 = scmp.eq.s32.totalorder %s33, 3
      %p184 = por %p182, %p183
      %p186 = scmp.ne.s32.totalorder %s171, %s185
      %p187 = scmp.eq.s32.totalorder %s33, 0
      %p188 = por %p186, %p187
      %s190 = sadd.s32 %s189, 1
      %p193 = scmp.eq.s32.totalorder %s27, 3
      %p194 = scmp.ne.s32.totalorder %s189, %s191
      %p195 = scmp.eq.s32.totalorder %s27, 0
      %p196 = por %p194, %p195
      %p197 = scmp.ne.s32.totalorder %s189, %s191
      %p198 = scmp.eq.s32.totalorder %s32, 3
      %p199 = por %p197, %p198
      %p200 = scmp.ne.s32.totalorder %s191, %s192
      %p201 = scmp.eq.s32.totalorder %s32, 0
      %p202 = por %p200, %p201
      %p203 = scmp.ne.s32.totalorder %s191, %s192
      %p204 = scmp.eq.s32.totalorder %s33, 3
      %p205 = por %p203, %p204
      %p207 = scmp.ne.s32.totalorder %s192, %s206
      %p208 = scmp.eq.s32.totalorder %s33, 0
      %p209 = por %p207, %p208
      %s211 = sadd.s32 %s210, 1
      %p214 = scmp.eq.s32.totalorder %s27, 3
      %p215 = scmp.ne.s32.totalorder %s210, %s212
      %p216 = scmp.eq.s32.totalorder %s27, 0
      %p217 = por %p215, %p216
      %p218 = scmp.ne.s32.totalorder %s210, %s212
      %p219 = scmp.eq.s32.totalorder %s32, 3
      %p220 = por %p218, %p219
      %p221 = scmp.ne.s32.totalorder %s212, %s213
      %p222 = scmp.eq.s32.totalorder %s32, 0
      %p223 = por %p221, %p222
      %p224 = scmp.ne.s32.totalorder %s212, %s213
      %p225 = scmp.eq.s32.totalorder %s33, 3
      %p226 = por %p224, %p225
      %p228 = scmp.ne.s32.totalorder %s213, %s227
      %p229 = scmp.eq.s32.totalorder %s33, 0
      %p230 = por %p228, %p229
      %s232 = sadd.s32 %s231, 1
      %p235 = scmp.eq.s32.totalorder %s27, 3
      %p236 = scmp.ne.s32.totalorder %s231, %s233
      %p237 = scmp.eq.s32.totalorder %s27, 0
      %p238 = por %p236, %p237
      %p239 = scmp.ne.s32.totalorder %s231, %s233
      %p240 = scmp.eq.s32.totalorder %s32, 3
      %p241 = por %p239, %p240
      %p242 = scmp.ne.s32.totalorder %s233, %s234
      %p243 = scmp.eq.s32.totalorder %s32, 0
      %p244 = por %p242, %p243
      %p245 = scmp.ne.s32.totalorder %s233, %s234
      %p246 = scmp.eq.s32.totalorder %s33, 3
      %p247 = por %p245, %p246
      %p249 = scmp.ne.s32.totalorder %s234, %s248
      %p250 = scmp.eq.s32.totalorder %s33, 0
      %p251 = por %p249, %p250
      %s253 = sadd.s32 %s252, 1
      %p256 = scmp.eq.s32.totalorder %s27, 3
      %p257 = scmp.ne.s32.totalorder %s252, %s254
      %p258 = scmp.eq.s32.totalorder %s27, 0
      %p259 = por %p257, %p258
      %p260 = scmp.ne.s32.totalorder %s252, %s254
      %p261 = scmp.eq.s32.totalorder %s32, 3
      %p262 = por %p260, %p261
      %p263 = scmp.ne.s32.totalorder %s254, %s255
      %p264 = scmp.eq.s32.totalorder %s32, 0
      %p265 = por %p263, %p264
      %p266 = scmp.ne.s32.totalorder %s254, %s255
      %p267 = scmp.eq.s32.totalorder %s33, 3
      %p268 = por %p266, %p267
      %p270 = scmp.ne.s32.totalorder %s255, %s269
      %p271 = scmp.eq.s32.totalorder %s33, 0
      %p272 = por %p270, %p271
      %s273 = ssub.s32 %s34, %s46
      %s274 = ssub.s32 %s35, %s42
      %s275 = sor.u32 %s273, %s274
      %p276 = scmp.eq.s32.totalorder %s275, 0
      %s278 = sadd.s32 %s277, 1
      %s279 = scalar_select %p276, %s277, %s278
      %p282 = pneg %p276
      %p283 = scmp.eq.s32.totalorder %s27, 3
      %p284 = por %p282, %p283
      %p285 = scmp.ne.s32.totalorder %s277, %s280
      %p286 = scmp.eq.s32.totalorder %s27, 0
      %p287 = por %p285, %p286
      %p288 = scmp.ne.s32.totalorder %s277, %s280
      %p289 = scmp.eq.s32.totalorder %s32, 3
      %p290 = por %p288, %p289
      %p291 = scmp.ne.s32.totalorder %s280, %s281
      %p292 = scmp.eq.s32.totalorder %s32, 0
      %p293 = por %p291, %p292
      %p294 = scmp.ne.s32.totalorder %s280, %s281
      %p295 = scmp.eq.s32.totalorder %s33, 3
      %p296 = por %p294, %p295
      %p298 = scmp.ne.s32.totalorder %s281, %s297
      %p299 = scmp.eq.s32.totalorder %s33, 0
      %p300 = por %p298, %p299
      %p301 = scmp.le.s32.totalorder 1, %s27
      %p302 = scmp.lt.s32.totalorder %s27, 5
      %p303 = pnand %p301, %p302
      %p304 = pneg %p303
      // Predicated region
      $region9: #{tpu_custom_call.1} parent=5 // pred_check
        _
      $region10: #{tpu_custom_call.1} parent=5 // pred_check_branch
        %306 = sbr.rel (%p303) target = $region12
      $region11: #{tpu_custom_call.1} parent=5 // pred_region
        %s307 = ssub.s32 %s27, 1
        // Predicated region
        $region13: #{tpu_custom_call.1} parent=11 // pred_check
          %p308 = pneg %p160
        $region14: #{tpu_custom_call.1} parent=11 // pred_check_branch
          %310 = sbr.rel (%p308) target = $region16
        $region15: #{tpu_custom_call.1} parent=11 // pred_region
          %s312 = ssub.s32 256, 256
          %313 = vsyncadd [#allocation9], %s312
          %s314 = sshll.u32 [#allocation8], 4
          %s315 = int_to_ptr.vmem [resolvable:$true] %s314
          %320 = dma.hbm_to_vmem [thread:$0]  %s3, 256, %s315, [#allocation9], 64, 64, 4
        $region16: #{tpu_custom_call.1} parent=11 // pred_fallthru
          _
        // Predicated region
        $region17: #{tpu_custom_call.1} parent=11 // pred_check
          %p321 = pneg %p181
        $region18: #{tpu_custom_call.1} parent=11 // pred_check_branch
          %323 = sbr.rel (%p321) target = $region20
        $region19: #{tpu_custom_call.1} parent=11 // pred_region
          %s325 = ssub.s32 576, 576
          %326 = vsyncadd [#allocation9], %s325
          %s327 = sshll.u32 [#allocation10], 4
          %s328 = int_to_ptr.vmem [resolvable:$true] %s327
          %333 = dma.hbm_to_vmem [thread:$0]  %s4, 576, %s328, [#allocation9], 64, 64, 4
        $region20: #{tpu_custom_call.1} parent=11 // pred_fallthru
          _
        // Predicated region
        $region21: #{tpu_custom_call.1} parent=11 // pred_check
          %p334 = pneg %p202
        $region22: #{tpu_custom_call.1} parent=11 // pred_check_branch
          %336 = sbr.rel (%p334) target = $region24
        $region23: #{tpu_custom_call.1} parent=11 // pred_region
          %s338 = ssub.s32 64, 64
          %339 = vsyncadd [#allocation12], %s338
          %s341 = sshll.u32 [#allocation11], 4
          %s342 = int_to_ptr.vmem [resolvable:$true] %s341
          %344 = dma.hbm_to_vmem [thread:$0]  %s5, 64, %s342, [#allocation12]
        $region24: #{tpu_custom_call.1} parent=11 // pred_fallthru
          _
        // Predicated region
        $region25: #{tpu_custom_call.1} parent=11 // pred_check
          %p345 = pneg %p223
        $region26: #{tpu_custom_call.1} parent=11 // pred_check_branch
          %347 = sbr.rel (%p345) target = $region28
        $region27: #{tpu_custom_call.1} parent=11 // pred_region
          %s349 = ssub.s32 16, 16
          %350 = vsyncadd [#allocation12], %s349
          %s352 = sshll.u32 [#allocation13], 4
          %s353 = int_to_ptr.vmem [resolvable:$true] %s352
          %355 = dma.hbm_to_vmem [thread:$0]  %s6, 16, %s353, [#allocation12]
        $region28: #{tpu_custom_call.1} parent=11 // pred_fallthru
          _
        // Predicated region
        $region29: #{tpu_custom_call.1} parent=11 // pred_check
          %p356 = pneg %p244
        $region30: #{tpu_custom_call.1} parent=11 // pred_check_branch
          %358 = sbr.rel (%p356) target = $region32
        $region31: #{tpu_custom_call.1} parent=11 // pred_region
          %s360 = ssub.s32 16, 16
          %361 = vsyncadd [#allocation15], %s360
          %s363 = sshll.u32 [#allocation14], 4
          %s364 = int_to_ptr.vmem [resolvable:$true] %s363
          %366 = dma.hbm_to_vmem [thread:$0]  %s7, 16, %s364, [#allocation15]
        $region32: #{tpu_custom_call.1} parent=11 // pred_fallthru
          _
        // Predicated region
        $region33: #{tpu_custom_call.1} parent=11 // pred_check
          %p367 = pneg %p265
        $region34: #{tpu_custom_call.1} parent=11 // pred_check_branch
          %369 = sbr.rel (%p367) target = $region36
        $region35: #{tpu_custom_call.1} parent=11 // pred_region
          %s371 = ssub.s32 16, 16
          %372 = vsyncadd [#allocation15], %s371
          %s374 = sshll.u32 [#allocation16], 4
          %s375 = int_to_ptr.vmem [resolvable:$true] %s374
          %377 = dma.hbm_to_vmem [thread:$0]  %s8, 16, %s375, [#allocation15]
        $region36: #{tpu_custom_call.1} parent=11 // pred_fallthru
          _
      $region12: #{tpu_custom_call.1} parent=5 // pred_fallthru
        _
      %p378 = scmp.lt.s32.totalorder %s27, 4
      // Predicated region
      $region37: #{tpu_custom_call.1} parent=5 // pred_check
        %p379 = pneg %p378
      $region38: #{tpu_custom_call.1} parent=5 // pred_check_branch
        %381 = sbr.rel (%p379) target = $region40
      $region39: #{tpu_custom_call.1} parent=5 // pred_region
        // Predicated region
        $region41: #{tpu_custom_call.1} parent=39 // pred_check
          %p382 = pneg %p61
        $region42: #{tpu_custom_call.1} parent=39 // pred_check_branch
          %384 = sbr.rel (%p382) target = $region44
        $region43: #{tpu_custom_call.1} parent=39 // pred_region
          %s385 = sand.u32 %s51, 1
          %s386 = scalar_lea.sflag [#allocation3], %s385
          %s387 = sand.u32 %s51, 1
          %s388 = smul.addr %s387, 64
          %s389 = scalar_lea.vmem [#allocation2], %s388
          %s390 = smul.u32 8, %s35
          %s392 = ssub.s32 1024, 1024
          %393 = vsyncadd %s386, %s392
          %s394 = smul.addr %s390, 2
          %s395 = smul.addr %s34, 32
          %s396 = sadd.s32 %s394, %s395
          %s397 = smul.addr %s396, 64
          %s398 = scalar_lea.hbm %s0, %s397
          %s399 = sshll.u32 %s389, 4
          %s400 = int_to_ptr.vmem [resolvable:$true] %s399
          %405 = dma.hbm_to_vmem [thread:$0]  %s398, 1024, %s400, %s386, 64, 64, 4
        $region44: #{tpu_custom_call.1} parent=39 // pred_fallthru
          _
        // Predicated region
        $region45: #{tpu_custom_call.1} parent=39 // pred_check
          %p406 = pneg %p97
        $region46: #{tpu_custom_call.1} parent=39 // pred_check_branch
          %408 = sbr.rel (%p406) target = $region48
        $region47: #{tpu_custom_call.1} parent=39 // pred_region
          %s409 = sand.u32 %s27, 1
          %s410 = scalar_lea.sflag [#allocation6], %s409
          %s411 = sand.u32 %s87, 1
          %s412 = smul.addr %s411, 8
          %s413 = scalar_lea.vmem [#allocation5], %s412
          %s414 = smul.u32 %s35, 8
          %s415 = ssub.s32 %s414, 1
          %p416 = scmp.gt.s32.totalorder %s415, 0
          %s417 = scalar_select %p416, %s415, 0
          %s419 = ssub.s32 128, 128
          %420 = vsyncadd %s410, %s419
          %s421 = smul.addr %s417, 2
          %s422 = smul.addr %s34, 32
          %s423 = sadd.s32 %s421, %s422
          %s424 = smul.addr %s423, 64
          %s425 = scalar_lea.hbm %s1, %s424
          %s426 = sshll.u32 %s413, 4
          %s427 = int_to_ptr.vmem [resolvable:$true] %s426
          %432 = dma.hbm_to_vmem [thread:$0]  %s425, 128, %s427, %s410, 64, 64, 4
        $region48: #{tpu_custom_call.1} parent=39 // pred_fallthru
          _
        // Predicated region
        $region49: #{tpu_custom_call.1} parent=39 // pred_check
          %p433 = pneg %p133
        $region50: #{tpu_custom_call.1} parent=39 // pred_check_branch
          %435 = sbr.rel (%p433) target = $region52
        $region51: #{tpu_custom_call.1} parent=39 // pred_region
          %s436 = sand.u32 %s27, 1
          %s437 = scalar_lea.sflag [#allocation6], %s436
          %s438 = sand.u32 %s123, 1
          %s439 = smul.addr %s438, 8
          %s440 = scalar_lea.vmem [#allocation7], %s439
          %s441 = sadd.s32 %s35, 1
          %s442 = smul.u32 %s441, 8
          %p443 = scmp.lt.s32.totalorder %s442, 15
          %s444 = scalar_select %p443, %s442, 15
          %s446 = ssub.s32 128, 128
          %447 = vsyncadd %s437, %s446
          %s448 = smul.addr %s444, 2
          %s449 = smul.addr %s34, 32
          %s450 = sadd.s32 %s448, %s449
          %s451 = smul.addr %s450, 64
          %s452 = scalar_lea.hbm %s2, %s451
          %s453 = sshll.u32 %s440, 4
          %s454 = int_to_ptr.vmem [resolvable:$true] %s453
          %459 = dma.hbm_to_vmem [thread:$0]  %s452, 128, %s454, %s437, 64, 64, 4
        $region52: #{tpu_custom_call.1} parent=39 // pred_fallthru
          _
      $region40: #{tpu_custom_call.1} parent=5 // pred_fallthru
        _
      %p460 = scmp.le.s32.totalorder 1, %s27
      %p461 = scmp.lt.s32.totalorder %s27, 5
      %p462 = pnand %p460, %p461
      %p463 = pneg %p462
      // Predicated region
      $region53: #{tpu_custom_call.1} parent=5 // pred_check
        _
      $region54: #{tpu_custom_call.1} parent=5 // pred_check_branch
        %465 = sbr.rel (%p462) target = $region56
      $region55: #{tpu_custom_call.1} parent=5 // pred_region
        %s466 = ssub.s32 %s27, 1
        %s467 = sand.u32 %s54, 1
        %s468 = scalar_lea.sflag [#allocation3], %s467
        %s469 = sand.u32 %s54, 1
        %s470 = smul.addr %s469, 64
        %s471 = scalar_lea.vmem [#allocation2], %s470
        // Predicated region
        $region57: #{tpu_custom_call.1} parent=55 // pred_check
          %p472 = pneg %p67
        $region58: #{tpu_custom_call.1} parent=55 // pred_check_branch
          %474 = sbr.rel (%p472) target = $region60
        $region59: #{tpu_custom_call.1} parent=55 // pred_region
          %475 = dma.done %s468, 1024
        $region60: #{tpu_custom_call.1} parent=55 // pred_fallthru
          _
        %s476 = sand.u32 %s32, 1
        %s477 = scalar_lea.sflag [#allocation6], %s476
        %s478 = sand.u32 %s90, 1
        %s479 = smul.addr %s478, 8
        %s480 = scalar_lea.vmem [#allocation5], %s479
        // Predicated region
        $region61: #{tpu_custom_call.1} parent=55 // pred_check
          %p481 = pneg %p103
        $region62: #{tpu_custom_call.1} parent=55 // pred_check_branch
          %483 = sbr.rel (%p481) target = $region64
        $region63: #{tpu_custom_call.1} parent=55 // pred_region
          %484 = dma.done %s477, 128
        $region64: #{tpu_custom_call.1} parent=55 // pred_fallthru
          _
        %s485 = sand.u32 %s32, 1
        %s486 = scalar_lea.sflag [#allocation6], %s485
        %s487 = sand.u32 %s126, 1
        %s488 = smul.addr %s487, 8
        %s489 = scalar_lea.vmem [#allocation7], %s488
        // Predicated region
        $region65: #{tpu_custom_call.1} parent=55 // pred_check
          %p490 = pneg %p139
        $region66: #{tpu_custom_call.1} parent=55 // pred_check_branch
          %492 = sbr.rel (%p490) target = $region68
        $region67: #{tpu_custom_call.1} parent=55 // pred_region
          %493 = dma.done %s486, 128
        $region68: #{tpu_custom_call.1} parent=55 // pred_fallthru
          _
        // Predicated region
        $region69: #{tpu_custom_call.1} parent=55 // pred_check
          %p494 = pneg %p160
        $region70: #{tpu_custom_call.1} parent=55 // pred_check_branch
          %496 = sbr.rel (%p494) target = $region72
        $region71: #{tpu_custom_call.1} parent=55 // pred_region
          %497 = dma.done [#allocation9], 256
        $region72: #{tpu_custom_call.1} parent=55 // pred_fallthru
          _
        // Predicated region
        $region73: #{tpu_custom_call.1} parent=55 // pred_check
          %p498 = pneg %p181
        $region74: #{tpu_custom_call.1} parent=55 // pred_check_branch
          %500 = sbr.rel (%p498) target = $region76
        $region75: #{tpu_custom_call.1} parent=55 // pred_region
          %501 = dma.done [#allocation9], 576
        $region76: #{tpu_custom_call.1} parent=55 // pred_fallthru
          _
        // Predicated region
        $region77: #{tpu_custom_call.1} parent=55 // pred_check
          %p502 = pneg %p202
        $region78: #{tpu_custom_call.1} parent=55 // pred_check_branch
          %504 = sbr.rel (%p502) target = $region80
        $region79: #{tpu_custom_call.1} parent=55 // pred_region
          %505 = dma.done [#allocation12], 64
        $region80: #{tpu_custom_call.1} parent=55 // pred_fallthru
          _
        // Predicated region
        $region81: #{tpu_custom_call.1} parent=55 // pred_check
          %p506 = pneg %p223
        $region82: #{tpu_custom_call.1} parent=55 // pred_check_branch
          %508 = sbr.rel (%p506) target = $region84
        $region83: #{tpu_custom_call.1} parent=55 // pred_region
          %509 = dma.done [#allocation12], 16
        $region84: #{tpu_custom_call.1} parent=55 // pred_fallthru
          _
        // Predicated region
        $region85: #{tpu_custom_call.1} parent=55 // pred_check
          %p510 = pneg %p244
        $region86: #{tpu_custom_call.1} parent=55 // pred_check_branch
          %512 = sbr.rel (%p510) target = $region88
        $region87: #{tpu_custom_call.1} parent=55 // pred_region
          %513 = dma.done [#allocation15], 16
        $region88: #{tpu_custom_call.1} parent=55 // pred_fallthru
          _
        // Predicated region
        $region89: #{tpu_custom_call.1} parent=55 // pred_check
          %p514 = pneg %p265
        $region90: #{tpu_custom_call.1} parent=55 // pred_check_branch
          %516 = sbr.rel (%p514) target = $region92
        $region91: #{tpu_custom_call.1} parent=55 // pred_region
          %517 = dma.done [#allocation15], 16
        $region92: #{tpu_custom_call.1} parent=55 // pred_fallthru
          _
        %s518 = sand.u32 %s54, 1
        %s519 = scalar_lea.sflag [#allocation3], %s518
        %s520 = sand.u32 %s54, 1
        %s521 = smul.addr %s520, 64
        %s522 = scalar_lea.vmem [#allocation2], %s521
        %p523 = pneg %p67
        %p524 = pneg %p64
        %s525 = sand.u32 %s32, 1
        %s526 = scalar_lea.sflag [#allocation6], %s525
        %s527 = sand.u32 %s90, 1
        %s528 = smul.addr %s527, 8
        %s529 = scalar_lea.vmem [#allocation5], %s528
        %p530 = pneg %p103
        %p531 = pneg %p100
        %s532 = sand.u32 %s32, 1
        %s533 = scalar_lea.sflag [#allocation6], %s532
        %s534 = sand.u32 %s126, 1
        %s535 = smul.addr %s534, 8
        %s536 = scalar_lea.vmem [#allocation7], %s535
        %p537 = pneg %p139
        %p538 = pneg %p136
        %p539 = pneg %p160
        %p540 = pneg %p157
        %p541 = pneg %p181
        %p542 = pneg %p178
        %p543 = pneg %p202
        %p544 = pneg %p199
        %p545 = pneg %p223
        %p546 = pneg %p220
        %p547 = pneg %p244
        %p548 = pneg %p241
        %p549 = pneg %p265
        %p550 = pneg %p262
        %p551 = pneg %p293
        %p552 = pneg %p290
        %s553 = sand.u32 %s280, 1
        %s554 = scalar_lea.sflag [#allocation4], %s553
        %s555 = sand.u32 %s280, 1
        %s556 = smul.addr %s555, 64
        %s557 = scalar_lea.vmem [#allocation17], %s556
        %s558 = smul.u32 8, %s37
        %s559 = smul.u32 %s37, 8
        %s560 = ssub.s32 %s559, 1
        %p561 = scmp.gt.s32.totalorder %s560, 0
        %s562 = scalar_select %p561, %s560, 0
        %s563 = sadd.s32 %s37, 1
        %s564 = smul.u32 %s563, 8
        %p565 = scmp.lt.s32.totalorder %s564, 15
        %s566 = scalar_select %p565, %s564, 15
        %s567 = smul.u32 8, %s37
        %v569 = vld [vmem:[#allocation8] sm:$0xf]
        %v570 = vld [vmem:[#allocation8 + $0x4] sm:$0xf]
        %v571 = vld [vmem:[#allocation8 + $0x8] sm:$0xf]
        %v572 = vld [vmem:[#allocation8 + $0xc] sm:$0xf]
        %v573 = vld [vmem:[#allocation13] sm:$0x1]
        %v574 = vld [vmem:[%s471] sm:$0xf]
        %v575 = vld [vmem:[%s471 + $0x4] sm:$0xf]
        %v576 = vld [vmem:[%s471 + $0x8] sm:$0xf]
        %v577 = vld [vmem:[%s471 + $0xc] sm:$0xf]
        %v578 = vld [vmem:[%s471 + $0x10] sm:$0xf]
        %v579 = vld [vmem:[%s471 + $0x14] sm:$0xf]
        %v580 = vld [vmem:[%s471 + $0x18] sm:$0xf]
        %v581 = vld [vmem:[%s471 + $0x1c] sm:$0xf]
        %v582 = vld [vmem:[%s471 + $0x20] sm:$0xf]
        %v583 = vld [vmem:[%s471 + $0x24] sm:$0xf]
        %v584 = vld [vmem:[%s471 + $0x28] sm:$0xf]
        %v585 = vld [vmem:[%s471 + $0x2c] sm:$0xf]
        %v586 = vld [vmem:[%s471 + $0x30] sm:$0xf]
        %v587 = vld [vmem:[%s471 + $0x34] sm:$0xf]
        %v588 = vld [vmem:[%s471 + $0x38] sm:$0xf]
        %v589 = vld [vmem:[%s471 + $0x3c] sm:$0xf]
        %v591 = vlaneseq
        %v592 = vshrl.u32 %v591, 7
        %v593 = vsub.s32 0, %v592
        %v594 = vrot.slane %v573, %v593
        %v612 = vunpack.c.l.b16 %v574
        %v613 = vunpack.c.l.b16 %v575
        %v614 = vunpack.c.l.b16 %v576
        %v615 = vunpack.c.l.b16 %v577
        %v616 = vunpack.c.l.b16 %v578
        %v617 = vunpack.c.l.b16 %v579
        %v618 = vunpack.c.l.b16 %v580
        %v619 = vunpack.c.l.b16 %v581
        %v620 = vunpack.c.l.b16 %v582
        %v621 = vunpack.c.l.b16 %v583
        %v622 = vunpack.c.l.b16 %v584
        %v623 = vunpack.c.l.b16 %v585
        %v624 = vunpack.c.l.b16 %v586
        %v625 = vunpack.c.l.b16 %v587
        %v626 = vunpack.c.l.b16 %v588
        %v627 = vunpack.c.l.b16 %v589
        %v628 = vpack.c.b16 %v613, %v612
        %v629 = vpack.c.b16 %v615, %v614
        %v630 = vpack.c.b16 %v617, %v616
        %v631 = vpack.c.b16 %v619, %v618
        %v632 = vpack.c.b16 %v621, %v620
        %v633 = vpack.c.b16 %v623, %v622
        %v634 = vpack.c.b16 %v625, %v624
        %v635 = vpack.c.b16 %v627, %v626
        %v640 = vunpack.c.l.b16 %v569
        %v641 = vunpack.c.l.b16 %v570
        %v642 = vunpack.c.l.b16 %v571
        %v643 = vunpack.c.l.b16 %v572
        %v644 = vpack.c.b16 %v641, %v640
        %v645 = vpack.c.b16 %v643, %v642
        %vm648 = vcmask 261120
        %v650 = vsel %vm648, %v628, 0
        %v653 = vsel %vm648, %v629, 0
        %v656 = vsel %vm648, %v630, 0
        %v659 = vsel %vm648, %v631, 0
        %v662 = vsel %vm648, %v632, 0
        %v665 = vsel %vm648, %v633, 0
        %v668 = vsel %vm648, %v634, 0
        %v671 = vsel %vm648, %v635, 0
        %673 = vmatprep.subr.bf16.mxu0 0
        %674 = vmatpush1.bf16.msra.mxu0 %v644
        %675 = vmatprep.subr.bf16.mxu0 0
        %676 = vmatpush1.bf16.msra.mxu0 %v645
        %677 = vmatprep.subr.bf16.mxu0 0
        %678 = vmatpush1.bf16.msra.mxu0 0
        %679 = vmatprep.subr.bf16.mxu0 0
        %680 = vmatpush1.bf16.msra.mxu0 0
        %681 = vmatprep.subr.bf16.mxu0 0
        %682 = vmatpush1.bf16.msra.mxu0 0
        %683 = vmatprep.subr.bf16.mxu0 0
        %684 = vmatpush1.bf16.msra.mxu0 0
        %685 = vmatprep.subr.bf16.mxu0 0
        %686 = vmatpush1.bf16.msra.mxu0 0
        %687 = vmatprep.subr.bf16.mxu0 0
        %688 = vmatpush1.bf16.msra.mxu0 0
        %689 = vmatprep.subr.bf16.mxu0 0
        %690 = vmatpush1.bf16.msra.mxu0 0
        %691 = vmatprep.subr.bf16.mxu0 0
        %692 = vmatpush1.bf16.msra.mxu0 0
        %693 = vmatprep.subr.bf16.mxu0 0
        %694 = vmatpush1.bf16.msra.mxu0 0
        %695 = vmatprep.subr.bf16.mxu0 0
        %696 = vmatpush1.bf16.msra.mxu0 0
        %697 = vmatprep.subr.bf16.mxu0 0
        %698 = vmatpush1.bf16.msra.mxu0 0
        %699 = vmatprep.subr.bf16.mxu0 0
        %700 = vmatpush1.bf16.msra.mxu0 0
        %701 = vmatprep.subr.bf16.mxu0 0
        %702 = vmatpush1.bf16.msra.mxu0 0
        %703 = vmatprep.subr.bf16.mxu0 0
        %704 = vmatpush1.bf16.msra.mxu0 0
        %705 = vmatprep.mubr.bf16.mxu0 0
        %706 = vmatmul.mubr.bf16.gmra.mrb[0].mxu0 %v650
        %v707 = vpop.f32.mrb[0].mxu0
        %v708 = vadd.f32 %v594, %v707
        %v709 = vpop.f32.mrb[0].mxu0
        %v710 = vpop.f32.mrb[0].mxu0
        %v711 = vadd.f32 %v594, %v710
        %v712 = vpop.f32.mrb[0].mxu0
        %713 = vmatprep.mubr.bf16.mxu0 0
        %714 = vmatmul.mubr.bf16.gmra.mrb[0].mxu0 %v653
        %v715 = vpop.f32.mrb[0].mxu0
        %v716 = vadd.f32 %v594, %v715
        %v717 = vpop.f32.mrb[0].mxu0
        %v718 = vpop.f32.mrb[0].mxu0
        %v719 = vadd.f32 %v594, %v718
        %v720 = vpop.f32.mrb[0].mxu0
        %721 = vmatprep.mubr.bf16.mxu0 0
        %722 = vmatmul.mubr.bf16.gmra.mrb[0].mxu0 %v656
        %v723 = vpop.f32.mrb[0].mxu0
        %v724 = vadd.f32 %v594, %v723
        %v725 = vpop.f32.mrb[0].mxu0
        %v726 = vpop.f32.mrb[0].mxu0
        %v727 = vadd.f32 %v594, %v726
        %v728 = vpop.f32.mrb[0].mxu0
        %729 = vmatprep.mubr.bf16.mxu0 0
        %730 = vmatmul.mubr.bf16.gmra.mrb[0].mxu0 %v659
        %v731 = vpop.f32.mrb[0].mxu0
        %v732 = vadd.f32 %v594, %v731
        %v733 = vpop.f32.mrb[0].mxu0
        %v734 = vpop.f32.mrb[0].mxu0
        %v735 = vadd.f32 %v594, %v734
        %v736 = vpop.f32.mrb[0].mxu0
        %737 = vmatprep.mubr.bf16.mxu0 0
        %738 = vmatmul.mubr.bf16.gmra.mrb[0].mxu0 %v662
        %v739 = vpop.f32.mrb[0].mxu0
        %v740 = vadd.f32 %v594, %v739
        %v741 = vpop.f32.mrb[0].mxu0
        %v742 = vpop.f32.mrb[0].mxu0
        %v743 = vadd.f32 %v594, %v742
        %v744 = vpop.f32.mrb[0].mxu0
        %745 = vmatprep.mubr.bf16.mxu0 0
        %746 = vmatmul.mubr.bf16.gmra.mrb[0].mxu0 %v665
        %v747 = vpop.f32.mrb[0].mxu0
        %v748 = vadd.f32 %v594, %v747
        %v749 = vpop.f32.mrb[0].mxu0
        %v750 = vpop.f32.mrb[0].mxu0
        %v751 = vadd.f32 %v594, %v750
        %v752 = vpop.f32.mrb[0].mxu0
        %753 = vmatprep.mubr.bf16.mxu0 0
        %754 = vmatmul.mubr.bf16.gmra.mrb[0].mxu0 %v668
        %v755 = vpop.f32.mrb[0].mxu0
        %v756 = vadd.f32 %v594, %v755
        %v757 = vpop.f32.mrb[0].mxu0
        %v758 = vpop.f32.mrb[0].mxu0
        %v759 = vadd.f32 %v594, %v758
        %v760 = vpop.f32.mrb[0].mxu0
        %761 = vmatprep.mubr.bf16.mxu0 0
        %762 = vmatmul.mubr.bf16.gmra.mrb[0].mxu0 %v671
        %v763 = vpop.f32.mrb[0].mxu0
        %v764 = vadd.f32 %v594, %v763
        %v765 = vpop.f32.mrb[0].mxu0
        %v766 = vpop.f32.mrb[0].mxu0
        %v767 = vadd.f32 %v594, %v766
        %v768 = vpop.f32.mrb[0].mxu0
        %769 = vdwg.mxu0
        %v770 = vmax.f32 %v708, 0.0
        %v771 = vmax.f32 %v711, 0.0
        %v772 = vmax.f32 %v716, 0.0
        %v773 = vmax.f32 %v719, 0.0
        %v774 = vmax.f32 %v724, 0.0
        %v775 = vmax.f32 %v727, 0.0
        %v776 = vmax.f32 %v732, 0.0
        %v777 = vmax.f32 %v735, 0.0
        %v778 = vmax.f32 %v740, 0.0
        %v779 = vmax.f32 %v743, 0.0
        %v780 = vmax.f32 %v748, 0.0
        %v781 = vmax.f32 %v751, 0.0
        %v782 = vmax.f32 %v756, 0.0
        %v783 = vmax.f32 %v759, 0.0
        %v784 = vmax.f32 %v764, 0.0
        %v785 = vmax.f32 %v767, 0.0
        %v786 = vld [vmem:[%s480] sm:$0xf]
        %v787 = vld [vmem:[%s480 + $0x4] sm:$0xf]
        %v790 = vunpack.c.l.b16 %v786
        %v791 = vunpack.c.l.b16 %v787
        %v792 = vpack.c.b16 %v791, %v790
        %v794 = vsel %vm648, %v792, 0
        %796 = vmatprep.subr.bf16.mxu0 0
        %797 = vmatpush1.bf16.msra.mxu0 %v644
        %798 = vmatprep.subr.bf16.mxu0 0
        %799 = vmatpush1.bf16.msra.mxu0 %v645
        %800 = vmatprep.subr.bf16.mxu0 0
        %801 = vmatpush1.bf16.msra.mxu0 0
        %802 = vmatprep.subr.bf16.mxu0 0
        %803 = vmatpush1.bf16.msra.mxu0 0
        %804 = vmatprep.subr.bf16.mxu0 0
        %805 = vmatpush1.bf16.msra.mxu0 0
        %806 = vmatprep.subr.bf16.mxu0 0
        %807 = vmatpush1.bf16.msra.mxu0 0
        %808 = vmatprep.subr.bf16.mxu0 0
        %809 = vmatpush1.bf16.msra.mxu0 0
        %810 = vmatprep.subr.bf16.mxu0 0
        %811 = vmatpush1.bf16.msra.mxu0 0
        %812 = vmatprep.subr.bf16.mxu0 0
        %813 = vmatpush1.bf16.msra.mxu0 0
        %814 = vmatprep.subr.bf16.mxu0 0
        %815 = vmatpush1.bf16.msra.mxu0 0
        %816 = vmatprep.subr.bf16.mxu0 0
        %817 = vmatpush1.bf16.msra.mxu0 0
        %818 = vmatprep.subr.bf16.mxu0 0
        %819 = vmatpush1.bf16.msra.mxu0 0
        %820 = vmatprep.subr.bf16.mxu0 0
        %821 = vmatpush1.bf16.msra.mxu0 0
        %822 = vmatprep.subr.bf16.mxu0 0
        %823 = vmatpush1.bf16.msra.mxu0 0
        %824 = vmatprep.subr.bf16.mxu0 0
        %825 = vmatpush1.bf16.msra.mxu0 0
        %826 = vmatprep.subr.bf16.mxu0 0
        %827 = vmatpush1.bf16.msra.mxu0 0
        %828 = vmatprep.mubr.bf16.mxu0 0
        %829 = vmatmul.mubr.bf16.gmra.mrb[0].mxu0 %v794
        %v830 = vpop.f32.mrb[0].mxu0
        %v831 = vadd.f32 %v594, %v830
        %v832 = vpop.f32.mrb[0].mxu0
        %v833 = vpop.f32.mrb[0].mxu0
        %v834 = vadd.f32 %v594, %v833
        %v835 = vpop.f32.mrb[0].mxu0
        %836 = vdwg.mxu0
        %v837 = vmax.f32 %v831, 0.0
        %v838 = vmax.f32 %v834, 0.0
        %v839 = vld [vmem:[%s489] sm:$0xf]
        %v840 = vld [vmem:[%s489 + $0x4] sm:$0xf]
        %v843 = vunpack.c.l.b16 %v839
        %v844 = vunpack.c.l.b16 %v840
        %v845 = vpack.c.b16 %v844, %v843
        %v847 = vsel %vm648, %v845, 0
        %849 = vmatprep.subr.bf16.mxu0 0
        %850 = vmatpush1.bf16.msra.mxu0 %v644
        %851 = vmatprep.subr.bf16.mxu0 0
        %852 = vmatpush1.bf16.msra.mxu0 %v645
        %853 = vmatprep.subr.bf16.mxu0 0
        %854 = vmatpush1.bf16.msra.mxu0 0
        %855 = vmatprep.subr.bf16.mxu0 0
        %856 = vmatpush1.bf16.msra.mxu0 0
        %857 = vmatprep.subr.bf16.mxu0 0
        %858 = vmatpush1.bf16.msra.mxu0 0
        %859 = vmatprep.subr.bf16.mxu0 0
        %860 = vmatpush1.bf16.msra.mxu0 0
        %861 = vmatprep.subr.bf16.mxu0 0
        %862 = vmatpush1.bf16.msra.mxu0 0
        %863 = vmatprep.subr.bf16.mxu0 0
        %864 = vmatpush1.bf16.msra.mxu0 0
        %865 = vmatprep.subr.bf16.mxu0 0
        %866 = vmatpush1.bf16.msra.mxu0 0
        %867 = vmatprep.subr.bf16.mxu0 0
        %868 = vmatpush1.bf16.msra.mxu0 0
        %869 = vmatprep.subr.bf16.mxu0 0
        %870 = vmatpush1.bf16.msra.mxu0 0
        %871 = vmatprep.subr.bf16.mxu0 0
        %872 = vmatpush1.bf16.msra.mxu0 0
        %873 = vmatprep.subr.bf16.mxu0 0
        %874 = vmatpush1.bf16.msra.mxu0 0
        %875 = vmatprep.subr.bf16.mxu0 0
        %876 = vmatpush1.bf16.msra.mxu0 0
        %877 = vmatprep.subr.bf16.mxu0 0
        %878 = vmatpush1.bf16.msra.mxu0 0
        %879 = vmatprep.subr.bf16.mxu0 0
        %880 = vmatpush1.bf16.msra.mxu0 0
        %881 = vmatprep.mubr.bf16.mxu0 0
        %882 = vmatmul.mubr.bf16.gmra.mrb[0].mxu0 %v847
        %v883 = vpop.f32.mrb[0].mxu0
        %v884 = vadd.f32 %v594, %v883
        %v885 = vpop.f32.mrb[0].mxu0
        %v886 = vpop.f32.mrb[0].mxu0
        %v887 = vadd.f32 %v594, %v886
        %v888 = vpop.f32.mrb[0].mxu0
        %889 = vdwg.mxu0
        %v890 = vmax.f32 %v884, 0.0
        %v891 = vmax.f32 %v887, 0.0
        %p892 = scmp.eq.s32.totalorder %s37, 0
        %s893 = scalar_select %p892, 1, 0
        %v894 = vstv %s893
        %vm895 = vcmp.eq.s32.totalorder %v894, 1
        %v896 = vsel %vm895, 0.0, %v837
        %v897 = vsel %vm895, 0.0, %v838
        %p898 = scmp.eq.s32.totalorder %s37, 1
        %s899 = scalar_select %p898, 1, 0
        %v900 = vstv %s899
        %vm901 = vcmp.eq.s32.totalorder %v900, 1
        %v902 = vsel %vm901, 0.0, %v890
        %v903 = vsel %vm901, 0.0, %v891
        %vm924 = vcmask 1040384
        %v925 = vrot.slane %v896, 7
        %v926 = vrot.slane %v897, 7
        %v927 = vsel %vm924, %v925, %v926
        %v928 = vrot.slane %v770, 7
        %v929 = vrot.slane %v771, 7
        %v930 = vsel %vm924, %v928, %v929
        %v931 = vrot.slane %v772, 7
        %v932 = vrot.slane %v773, 7
        %v933 = vsel %vm924, %v931, %v932
        %v934 = vrot.slane %v774, 7
        %v935 = vrot.slane %v775, 7
        %v936 = vsel %vm924, %v934, %v935
        %v937 = vrot.slane %v776, 7
        %v938 = vrot.slane %v777, 7
        %v939 = vsel %vm924, %v937, %v938
        %v940 = vrot.slane %v778, 7
        %v941 = vrot.slane %v779, 7
        %v942 = vsel %vm924, %v940, %v941
        %v943 = vrot.slane %v780, 7
        %v944 = vrot.slane %v781, 7
        %v945 = vsel %vm924, %v943, %v944
        %v946 = vrot.slane %v782, 7
        %v947 = vrot.slane %v783, 7
        %v948 = vsel %vm924, %v946, %v947
        %v949 = vrot.slane %v784, 7
        %v950 = vrot.slane %v785, 7
        %v951 = vsel %vm924, %v949, %v950
        %v952 = vrot.slane %v902, 7
        %v953 = vrot.slane %v903, 7
        %v954 = vsel %vm924, %v952, %v953
        %v985 = vsel %vm924, 0.0, %v925
        %v986 = vsel %vm924, 0.0, %v928
        %v987 = vsel %vm924, 0.0, %v931
        %v988 = vsel %vm924, 0.0, %v934
        %v989 = vsel %vm924, 0.0, %v937
        %v990 = vsel %vm924, 0.0, %v940
        %v991 = vsel %vm924, 0.0, %v943
        %v992 = vsel %vm924, 0.0, %v946
        %v993 = vsel %vm924, 0.0, %v949
        %v994 = vsel %vm924, 0.0, %v952
        %v995 = vsel %vm924, %v926, 0.0
        %v996 = vsel %vm924, %v929, 0.0
        %v997 = vsel %vm924, %v932, 0.0
        %v998 = vsel %vm924, %v935, 0.0
        %v999 = vsel %vm924, %v938, 0.0
        %v1000 = vsel %vm924, %v941, 0.0
        %v1001 = vsel %vm924, %v944, 0.0
        %v1002 = vsel %vm924, %v947, 0.0
        %v1003 = vsel %vm924, %v950, 0.0
        %v1004 = vsel %vm924, %v953, 0.0
        %v1005 = vpack.c.bf16 %v927, %v985
        %v1006 = vpack.c.bf16 %v995, %v995
        %v1007 = vpack.c.bf16 %v930, %v986
        %v1008 = vpack.c.bf16 %v996, %v996
        %v1009 = vpack.c.bf16 %v933, %v987
        %v1010 = vpack.c.bf16 %v997, %v997
        %v1011 = vpack.c.bf16 %v936, %v988
        %v1012 = vpack.c.bf16 %v998, %v998
        %v1013 = vpack.c.bf16 %v939, %v989
        %v1014 = vpack.c.bf16 %v999, %v999
        %v1015 = vpack.c.bf16 %v942, %v990
        %v1016 = vpack.c.bf16 %v1000, %v1000
        %v1017 = vpack.c.bf16 %v945, %v991
        %v1018 = vpack.c.bf16 %v1001, %v1001
        %v1019 = vpack.c.bf16 %v948, %v992
        %v1020 = vpack.c.bf16 %v1002, %v1002
        %v1021 = vpack.c.bf16 %v951, %v993
        %v1022 = vpack.c.bf16 %v1003, %v1003
        %v1023 = vpack.c.bf16 %v954, %v994
        %v1024 = vpack.c.bf16 %v1004, %v1004
        %vm1025 = vsmask.f32 7424
        %v1027 = vshrl.u32 %v1005, 16
        %v1029 = vshll.u32 %v1005, 16
        %v1031 = vrot.slane %v1029, 1
        %v1032 = vor.u32 %v1027, %v1031
        %v1034 = vshll.u32 %v1006, 16
        %v1036 = vrot.slane %v1034, 1
        %v1037 = vsel %vm1025, %v1032, %v1036
        %v1039 = vshrl.u32 %v1007, 16
        %v1041 = vshll.u32 %v1007, 16
        %v1043 = vrot.slane %v1041, 1
        %v1044 = vor.u32 %v1039, %v1043
        %v1046 = vshll.u32 %v1008, 16
        %v1048 = vrot.slane %v1046, 1
        %v1049 = vsel %vm1025, %v1044, %v1048
        %v1051 = vshrl.u32 %v1009, 16
        %v1053 = vshll.u32 %v1009, 16
        %v1055 = vrot.slane %v1053, 1
        %v1056 = vor.u32 %v1051, %v1055
        %v1058 = vshll.u32 %v1010, 16
        %v1060 = vrot.slane %v1058, 1
        %v1061 = vsel %vm1025, %v1056, %v1060
        %v1063 = vshrl.u32 %v1011, 16
        %v1065 = vshll.u32 %v1011, 16
        %v1067 = vrot.slane %v1065, 1
        %v1068 = vor.u32 %v1063, %v1067
        %v1070 = vshll.u32 %v1012, 16
        %v1072 = vrot.slane %v1070, 1
        %v1073 = vsel %vm1025, %v1068, %v1072
        %v1075 = vshrl.u32 %v1013, 16
        %v1077 = vshll.u32 %v1013, 16
        %v1079 = vrot.slane %v1077, 1
        %v1080 = vor.u32 %v1075, %v1079
        %v1082 = vshll.u32 %v1014, 16
        %v1084 = vrot.slane %v1082, 1
        %v1085 = vsel %vm1025, %v1080, %v1084
        %v1087 = vshrl.u32 %v1015, 16
        %v1089 = vshll.u32 %v1015, 16
        %v1091 = vrot.slane %v1089, 1
        %v1092 = vor.u32 %v1087, %v1091
        %v1094 = vshll.u32 %v1016, 16
        %v1096 = vrot.slane %v1094, 1
        %v1097 = vsel %vm1025, %v1092, %v1096
        %v1099 = vshrl.u32 %v1017, 16
        %v1101 = vshll.u32 %v1017, 16
        %v1103 = vrot.slane %v1101, 1
        %v1104 = vor.u32 %v1099, %v1103
        %v1106 = vshll.u32 %v1018, 16
        %v1108 = vrot.slane %v1106, 1
        %v1109 = vsel %vm1025, %v1104, %v1108
        %v1111 = vshrl.u32 %v1019, 16
        %v1113 = vshll.u32 %v1019, 16
        %v1115 = vrot.slane %v1113, 1
        %v1116 = vor.u32 %v1111, %v1115
        %v1118 = vshll.u32 %v1020, 16
        %v1120 = vrot.slane %v1118, 1
        %v1121 = vsel %vm1025, %v1116, %v1120
        %v1123 = vshrl.u32 %v1021, 16
        %v1125 = vshll.u32 %v1021, 16
        %v1127 = vrot.slane %v1125, 1
        %v1128 = vor.u32 %v1123, %v1127
        %v1130 = vshll.u32 %v1022, 16
        %v1132 = vrot.slane %v1130, 1
        %v1133 = vsel %vm1025, %v1128, %v1132
        %v1135 = vshrl.u32 %v1023, 16
        %v1137 = vshll.u32 %v1023, 16
        %v1139 = vrot.slane %v1137, 1
        %v1140 = vor.u32 %v1135, %v1139
        %v1142 = vshll.u32 %v1024, 16
        %v1144 = vrot.slane %v1142, 1
        %v1145 = vsel %vm1025, %v1140, %v1144
        %1146 = vrot.lane.b32.xlu0 %v1037, 8
        %v1147 = vpop.permute.xlu0 %1146
        %1148 = vrot.lane.b32.xlu0 %v1049, 8
        %v1149 = vpop.permute.xlu0 %1148
        %1150 = vrot.lane.b32.xlu0 %v1061, 8
        %v1151 = vpop.permute.xlu0 %1150
        %1152 = vrot.lane.b32.xlu0 %v1073, 8
        %v1153 = vpop.permute.xlu0 %1152
        %1154 = vrot.lane.b32.xlu0 %v1085, 8
        %v1155 = vpop.permute.xlu0 %1154
        %1156 = vrot.lane.b32.xlu0 %v1097, 8
        %v1157 = vpop.permute.xlu0 %1156
        %1158 = vrot.lane.b32.xlu0 %v1109, 8
        %v1159 = vpop.permute.xlu0 %1158
        %1160 = vrot.lane.b32.xlu0 %v1121, 8
        %v1161 = vpop.permute.xlu0 %1160
        %1162 = vrot.lane.b32.xlu0 %v1133, 8
        %v1163 = vpop.permute.xlu0 %1162
        %1164 = vrot.lane.b32.xlu0 %v1145, 8
        %v1165 = vpop.permute.xlu0 %1164
        %vm1186 = vcmask 1046528
        %v1187 = vrot.slane %v1005, 1
        %v1188 = vrot.slane %v1006, 1
        %v1189 = vsel %vm1186, %v1187, %v1188
        %v1190 = vrot.slane %v1007, 1
        %v1191 = vrot.slane %v1008, 1
        %v1192 = vsel %vm1186, %v1190, %v1191
        %v1193 = vrot.slane %v1009, 1
        %v1194 = vrot.slane %v1010, 1
        %v1195 = vsel %vm1186, %v1193, %v1194
        %v1196 = vrot.slane %v1011, 1
        %v1197 = vrot.slane %v1012, 1
        %v1198 = vsel %vm1186, %v1196, %v1197
        %v1199 = vrot.slane %v1013, 1
        %v1200 = vrot.slane %v1014, 1
        %v1201 = vsel %vm1186, %v1199, %v1200
        %v1202 = vrot.slane %v1015, 1
        %v1203 = vrot.slane %v1016, 1
        %v1204 = vsel %vm1186, %v1202, %v1203
        %v1205 = vrot.slane %v1017, 1
        %v1206 = vrot.slane %v1018, 1
        %v1207 = vsel %vm1186, %v1205, %v1206
        %v1208 = vrot.slane %v1019, 1
        %v1209 = vrot.slane %v1020, 1
        %v1210 = vsel %vm1186, %v1208, %v1209
        %v1211 = vrot.slane %v1021, 1
        %v1212 = vrot.slane %v1022, 1
        %v1213 = vsel %vm1186, %v1211, %v1212
        %v1214 = vrot.slane %v1023, 1
        %v1215 = vrot.slane %v1024, 1
        %v1216 = vsel %vm1186, %v1214, %v1215
        %1217 = vrot.lane.b32.xlu0 %v1189, 16
        %v1218 = vpop.permute.xlu0 %1217
        %1219 = vrot.lane.b32.xlu0 %v1192, 16
        %v1220 = vpop.permute.xlu0 %1219
        %1221 = vrot.lane.b32.xlu0 %v1195, 16
        %v1222 = vpop.permute.xlu0 %1221
        %1223 = vrot.lane.b32.xlu0 %v1198, 16
        %v1224 = vpop.permute.xlu0 %1223
        %1225 = vrot.lane.b32.xlu0 %v1201, 16
        %v1226 = vpop.permute.xlu0 %1225
        %1227 = vrot.lane.b32.xlu0 %v1204, 16
        %v1228 = vpop.permute.xlu0 %1227
        %1229 = vrot.lane.b32.xlu0 %v1207, 16
        %v1230 = vpop.permute.xlu0 %1229
        %1231 = vrot.lane.b32.xlu0 %v1210, 16
        %v1232 = vpop.permute.xlu0 %1231
        %1233 = vrot.lane.b32.xlu0 %v1213, 16
        %v1234 = vpop.permute.xlu0 %1233
        %1235 = vrot.lane.b32.xlu0 %v1216, 16
        %v1236 = vpop.permute.xlu0 %1235
        %vm1237 = vcmask 64512
        %v1239 = vsel %vm1237, %v1005, %v1147
        %v1241 = vsel %vm1237, %v1007, %v1149
        %v1243 = vsel %vm1237, %v1009, %v1151
        %v1245 = vsel %vm1237, %v1011, %v1153
        %v1247 = vsel %vm1237, %v1013, %v1155
        %v1249 = vsel %vm1237, %v1015, %v1157
        %v1251 = vsel %vm1237, %v1017, %v1159
        %v1253 = vsel %vm1237, %v1019, %v1161
        %v1255 = vsel %vm1237, %v1021, %v1163
        %v1257 = vsel %vm1237, %v1023, %v1165
        %vm1258 = vcmask 130048
        %v1260 = vsel %vm1258, %v1239, %v1218
        %v1262 = vsel %vm1258, %v1241, %v1220
        %v1264 = vsel %vm1258, %v1243, %v1222
        %v1266 = vsel %vm1258, %v1245, %v1224
        %v1268 = vsel %vm1258, %v1247, %v1226
        %v1270 = vsel %vm1258, %v1249, %v1228
        %v1272 = vsel %vm1258, %v1251, %v1230
        %v1274 = vsel %vm1258, %v1253, %v1232
        %v1276 = vsel %vm1258, %v1255, %v1234
        %v1278 = vsel %vm1258, %v1257, %v1236
        %v1279 = vld [vmem:[#allocation14] sm:$0x1]
        %v1280 = vld [vmem:[#allocation10] sm:$0xf]
        %v1281 = vld [vmem:[#allocation10 + $0x4] sm:$0xf]
        %v1282 = vld [vmem:[#allocation10 + $0x8] sm:$0xf]
        %v1286 = vunpack.c.l.b16 %v1280
        %v1287 = vunpack.c.l.b16 %v1281
        %v1288 = vunpack.c.l.b16 %v1282
        %v1289 = vpack.c.b16 %v1287, %v1286
        %v1290 = vpack.c.b16 %v1288, %v1288
        %vm1292 = vcmask 195584
        %v1293 = vsel %vm1292, %v1260, 0
        %v1295 = vsel %vm1292, %v1262, 0
        %v1297 = vsel %vm1292, %v1264, 0
        %v1299 = vsel %vm1292, %v1266, 0
        %v1301 = vsel %vm1292, %v1268, 0
        %v1303 = vsel %vm1292, %v1270, 0
        %v1305 = vsel %vm1292, %v1272, 0
        %v1307 = vsel %vm1292, %v1274, 0
        %vm1309 = vcmask 1043456
        %v1311 = vsel %vm1309, %v1290, 0
        %1313 = vmatprep.subr.bf16.mxu0 0
        %1314 = vmatpush1.bf16.msra.mxu0 %v1289
        %1315 = vmatprep.subr.bf16.mxu0 0
        %1316 = vmatpush1.bf16.msra.mxu0 %v1311
        %1317 = vmatprep.subr.bf16.mxu0 0
        %1318 = vmatpush1.bf16.msra.mxu0 0
        %1319 = vmatprep.subr.bf16.mxu0 0
        %1320 = vmatpush1.bf16.msra.mxu0 0
        %1321 = vmatprep.subr.bf16.mxu0 0
        %1322 = vmatpush1.bf16.msra.mxu0 0
        %1323 = vmatprep.subr.bf16.mxu0 0
        %1324 = vmatpush1.bf16.msra.mxu0 0
        %1325 = vmatprep.subr.bf16.mxu0 0
        %1326 = vmatpush1.bf16.msra.mxu0 0
        %1327 = vmatprep.subr.bf16.mxu0 0
        %1328 = vmatpush1.bf16.msra.mxu0 0
        %1329 = vmatprep.subr.bf16.mxu0 0
        %1330 = vmatpush1.bf16.msra.mxu0 0
        %1331 = vmatprep.subr.bf16.mxu0 0
        %1332 = vmatpush1.bf16.msra.mxu0 0
        %1333 = vmatprep.subr.bf16.mxu0 0
        %1334 = vmatpush1.bf16.msra.mxu0 0
        %1335 = vmatprep.subr.bf16.mxu0 0
        %1336 = vmatpush1.bf16.msra.mxu0 0
        %1337 = vmatprep.subr.bf16.mxu0 0
        %1338 = vmatpush1.bf16.msra.mxu0 0
        %1339 = vmatprep.subr.bf16.mxu0 0
        %1340 = vmatpush1.bf16.msra.mxu0 0
        %1341 = vmatprep.subr.bf16.mxu0 0
        %1342 = vmatpush1.bf16.msra.mxu0 0
        %1343 = vmatprep.subr.bf16.mxu0 0
        %1344 = vmatpush1.bf16.msra.mxu0 0
        %1345 = vmatprep.mubr.bf16.mxu0 0
        %1346 = vmatmul.mubr.bf16.gmra.mrb[0].mxu0 %v1293
        %v1347 = vpop.f32.mrb[0].mxu0
        %v1348 = vadd.f32 0.0, %v1347
        %v1349 = vpop.f32.mrb[0].mxu0
        %v1350 = vpop.f32.mrb[0].mxu0
        %v1351 = vadd.f32 0.0, %v1350
        %v1352 = vpop.f32.mrb[0].mxu0
        %1353 = vmatprep.mubr.bf16.mxu0 0
        %1354 = vmatmul.mubr.bf16.gmra.mrb[0].mxu0 %v1295
        %v1355 = vpop.f32.mrb[0].mxu0
        %v1356 = vadd.f32 0.0, %v1355
        %v1357 = vpop.f32.mrb[0].mxu0
        %v1358 = vpop.f32.mrb[0].mxu0
        %v1359 = vadd.f32 0.0, %v1358
        %v1360 = vpop.f32.mrb[0].mxu0
        %1361 = vmatprep.mubr.bf16.mxu0 0
        %1362 = vmatmul.mubr.bf16.gmra.mrb[0].mxu0 %v1297
        %v1363 = vpop.f32.mrb[0].mxu0
        %v1364 = vadd.f32 0.0, %v1363
        %v1365 = vpop.f32.mrb[0].mxu0
        %v1366 = vpop.f32.mrb[0].mxu0
        %v1367 = vadd.f32 0.0, %v1366
        %v1368 = vpop.f32.mrb[0].mxu0
        %1369 = vmatprep.mubr.bf16.mxu0 0
        %1370 = vmatmul.mubr.bf16.gmra.mrb[0].mxu0 %v1299
        %v1371 = vpop.f32.mrb[0].mxu0
        %v1372 = vadd.f32 0.0, %v1371
        %v1373 = vpop.f32.mrb[0].mxu0
        %v1374 = vpop.f32.mrb[0].mxu0
        %v1375 = vadd.f32 0.0, %v1374
        %v1376 = vpop.f32.mrb[0].mxu0
        %1377 = vmatprep.mubr.bf16.mxu0 0
        %1378 = vmatmul.mubr.bf16.gmra.mrb[0].mxu0 %v1301
        %v1379 = vpop.f32.mrb[0].mxu0
        %v1380 = vadd.f32 0.0, %v1379
        %v1381 = vpop.f32.mrb[0].mxu0
        %v1382 = vpop.f32.mrb[0].mxu0
        %v1383 = vadd.f32 0.0, %v1382
        %v1384 = vpop.f32.mrb[0].mxu0
        %1385 = vmatprep.mubr.bf16.mxu0 0
        %1386 = vmatmul.mubr.bf16.gmra.mrb[0].mxu0 %v1303
        %v1387 = vpop.f32.mrb[0].mxu0
        %v1388 = vadd.f32 0.0, %v1387
        %v1389 = vpop.f32.mrb[0].mxu0
        %v1390 = vpop.f32.mrb[0].mxu0
        %v1391 = vadd.f32 0.0, %v1390
        %v1392 = vpop.f32.mrb[0].mxu0
        %1393 = vmatprep.mubr.bf16.mxu0 0
        %1394 = vmatmul.mubr.bf16.gmra.mrb[0].mxu0 %v1305
        %v1395 = vpop.f32.mrb[0].mxu0
        %v1396 = vadd.f32 0.0, %v1395
        %v1397 = vpop.f32.mrb[0].mxu0
        %v1398 = vpop.f32.mrb[0].mxu0
        %v1399 = vadd.f32 0.0, %v1398
        %v1400 = vpop.f32.mrb[0].mxu0
        %1401 = vmatprep.mubr.bf16.mxu0 0
        %1402 = vmatmul.mubr.bf16.gmra.mrb[0].mxu0 %v1307
        %v1403 = vpop.f32.mrb[0].mxu0
        %v1404 = vadd.f32 0.0, %v1403
        %v1405 = vpop.f32.mrb[0].mxu0
        %v1406 = vpop.f32.mrb[0].mxu0
        %v1407 = vadd.f32 0.0, %v1406
        %v1408 = vpop.f32.mrb[0].mxu0
        %1409 = vdwg.mxu0
        %v1411 = vlaneseq
        %v1412 = vshrl.u32 %v1411, 7
        %v1413 = vsub.s32 0, %v1412
        %v1414 = vrot.slane %v1279, %v1413
        %v1416 = vadd.f32 %v1414, %v1348
        %v1417 = vadd.f32 %v1414, %v1351
        %v1418 = vadd.f32 %v1414, %v1356
        %v1419 = vadd.f32 %v1414, %v1359
        %v1420 = vadd.f32 %v1414, %v1364
        %v1421 = vadd.f32 %v1414, %v1367
        %v1422 = vadd.f32 %v1414, %v1372
        %v1423 = vadd.f32 %v1414, %v1375
        %v1424 = vadd.f32 %v1414, %v1380
        %v1425 = vadd.f32 %v1414, %v1383
        %v1426 = vadd.f32 %v1414, %v1388
        %v1427 = vadd.f32 %v1414, %v1391
        %v1428 = vadd.f32 %v1414, %v1396
        %v1429 = vadd.f32 %v1414, %v1399
        %v1430 = vadd.f32 %v1414, %v1404
        %v1431 = vadd.f32 %v1414, %v1407
        %s1432 = scalar_lea.vmem [#allocation10], 12
        %v1433 = vld [vmem:[%s1432] sm:$0xf]
        %v1434 = vld [vmem:[%s1432 + $0x4] sm:$0xf]
        %v1435 = vld [vmem:[%s1432 + $0x8] sm:$0xf]
        %v1439 = vunpack.c.l.b16 %v1433
        %v1440 = vunpack.c.l.b16 %v1434
        %v1441 = vunpack.c.l.b16 %v1435
        %v1442 = vpack.c.b16 %v1440, %v1439
        %v1443 = vpack.c.b16 %v1441, %v1441
        %v1445 = vsel %vm1292, %v1276, 0
        %v1448 = vsel %vm1309, %v1443, 0
        %1450 = vmatprep.subr.bf16.mxu0 0
        %1451 = vmatpush1.bf16.msra.mxu0 %v1442
        %1452 = vmatprep.subr.bf16.mxu0 0
        %1453 = vmatpush1.bf16.msra.mxu0 %v1448
        %1454 = vmatprep.subr.bf16.mxu0 0
        %1455 = vmatpush1.bf16.msra.mxu0 0
        %1456 = vmatprep.subr.bf16.mxu0 0
        %1457 = vmatpush1.bf16.msra.mxu0 0
        %1458 = vmatprep.subr.bf16.mxu0 0
        %1459 = vmatpush1.bf16.msra.mxu0 0
        %1460 = vmatprep.subr.bf16.mxu0 0
        %1461 = vmatpush1.bf16.msra.mxu0 0
        %1462 = vmatprep.subr.bf16.mxu0 0
        %1463 = vmatpush1.bf16.msra.mxu0 0
        %1464 = vmatprep.subr.bf16.mxu0 0
        %1465 = vmatpush1.bf16.msra.mxu0 0
        %1466 = vmatprep.subr.bf16.mxu0 0
        %1467 = vmatpush1.bf16.msra.mxu0 0
        %1468 = vmatprep.subr.bf16.mxu0 0
        %1469 = vmatpush1.bf16.msra.mxu0 0
        %1470 = vmatprep.subr.bf16.mxu0 0
        %1471 = vmatpush1.bf16.msra.mxu0 0
        %1472 = vmatprep.subr.bf16.mxu0 0
        %1473 = vmatpush1.bf16.msra.mxu0 0
        %1474 = vmatprep.subr.bf16.mxu0 0
        %1475 = vmatpush1.bf16.msra.mxu0 0
        %1476 = vmatprep.subr.bf16.mxu0 0
        %1477 = vmatpush1.bf16.msra.mxu0 0
        %1478 = vmatprep.subr.bf16.mxu0 0
        %1479 = vmatpush1.bf16.msra.mxu0 0
        %1480 = vmatprep.subr.bf16.mxu0 0
        %1481 = vmatpush1.bf16.msra.mxu0 0
        %1482 = vmatprep.mubr.bf16.mxu0 0
        %1483 = vmatmul.mubr.bf16.gmra.mrb[0].mxu0 %v1295
        %v1484 = vpop.f32.mrb[0].mxu0
        %v1485 = vadd.f32 0.0, %v1484
        %v1486 = vpop.f32.mrb[0].mxu0
        %v1487 = vpop.f32.mrb[0].mxu0
        %v1488 = vadd.f32 0.0, %v1487
        %v1489 = vpop.f32.mrb[0].mxu0
        %1490 = vmatprep.mubr.bf16.mxu0 0
        %1491 = vmatmul.mubr.bf16.gmra.mrb[0].mxu0 %v1297
        %v1492 = vpop.f32.mrb[0].mxu0
        %v1493 = vadd.f32 0.0, %v1492
        %v1494 = vpop.f32.mrb[0].mxu0
        %v1495 = vpop.f32.mrb[0].mxu0
        %v1496 = vadd.f32 0.0, %v1495
        %v1497 = vpop.f32.mrb[0].mxu0
        %1498 = vmatprep.mubr.bf16.mxu0 0
        %1499 = vmatmul.mubr.bf16.gmra.mrb[0].mxu0 %v1299
        %v1500 = vpop.f32.mrb[0].mxu0
        %v1501 = vadd.f32 0.0, %v1500
        %v1502 = vpop.f32.mrb[0].mxu0
        %v1503 = vpop.f32.mrb[0].mxu0
        %v1504 = vadd.f32 0.0, %v1503
        %v1505 = vpop.f32.mrb[0].mxu0
        %1506 = vmatprep.mubr.bf16.mxu0 0
        %1507 = vmatmul.mubr.bf16.gmra.mrb[0].mxu0 %v1301
        %v1508 = vpop.f32.mrb[0].mxu0
        %v1509 = vadd.f32 0.0, %v1508
        %v1510 = vpop.f32.mrb[0].mxu0
        %v1511 = vpop.f32.mrb[0].mxu0
        %v1512 = vadd.f32 0.0, %v1511
        %v1513 = vpop.f32.mrb[0].mxu0
        %1514 = vmatprep.mubr.bf16.mxu0 0
        %1515 = vmatmul.mubr.bf16.gmra.mrb[0].mxu0 %v1303
        %v1516 = vpop.f32.mrb[0].mxu0
        %v1517 = vadd.f32 0.0, %v1516
        %v1518 = vpop.f32.mrb[0].mxu0
        %v1519 = vpop.f32.mrb[0].mxu0
        %v1520 = vadd.f32 0.0, %v1519
        %v1521 = vpop.f32.mrb[0].mxu0
        %1522 = vmatprep.mubr.bf16.mxu0 0
        %1523 = vmatmul.mubr.bf16.gmra.mrb[0].mxu0 %v1305
        %v1524 = vpop.f32.mrb[0].mxu0
        %v1525 = vadd.f32 0.0, %v1524
        %v1526 = vpop.f32.mrb[0].mxu0
        %v1527 = vpop.f32.mrb[0].mxu0
        %v1528 = vadd.f32 0.0, %v1527
        %v1529 = vpop.f32.mrb[0].mxu0
        %1530 = vmatprep.mubr.bf16.mxu0 0
        %1531 = vmatmul.mubr.bf16.gmra.mrb[0].mxu0 %v1307
        %v1532 = vpop.f32.mrb[0].mxu0
        %v1533 = vadd.f32 0.0, %v1532
        %v1534 = vpop.f32.mrb[0].mxu0
        %v1535 = vpop.f32.mrb[0].mxu0
        %v1536 = vadd.f32 0.0, %v1535
        %v1537 = vpop.f32.mrb[0].mxu0
        %1538 = vmatprep.mubr.bf16.mxu0 0
        %1539 = vmatmul.mubr.bf16.gmra.mrb[0].mxu0 %v1445
        %v1540 = vpop.f32.mrb[0].mxu0
        %v1541 = vadd.f32 0.0, %v1540
        %v1542 = vpop.f32.mrb[0].mxu0
        %v1543 = vpop.f32.mrb[0].mxu0
        %v1544 = vadd.f32 0.0, %v1543
        %v1545 = vpop.f32.mrb[0].mxu0
        %1546 = vdwg.mxu0
        %v1547 = vadd.f32 %v1416, %v1485
        %v1548 = vadd.f32 %v1417, %v1488
        %v1549 = vadd.f32 %v1418, %v1493
        %v1550 = vadd.f32 %v1419, %v1496
        %v1551 = vadd.f32 %v1420, %v1501
        %v1552 = vadd.f32 %v1421, %v1504
        %v1553 = vadd.f32 %v1422, %v1509
        %v1554 = vadd.f32 %v1423, %v1512
        %v1555 = vadd.f32 %v1424, %v1517
        %v1556 = vadd.f32 %v1425, %v1520
        %v1557 = vadd.f32 %v1426, %v1525
        %v1558 = vadd.f32 %v1427, %v1528
        %v1559 = vadd.f32 %v1428, %v1533
        %v1560 = vadd.f32 %v1429, %v1536
        %v1561 = vadd.f32 %v1430, %v1541
        %v1562 = vadd.f32 %v1431, %v1544
        %s1563 = scalar_lea.vmem [#allocation10], 24
        %v1564 = vld [vmem:[%s1563] sm:$0xf]
        %v1565 = vld [vmem:[%s1563 + $0x4] sm:$0xf]
        %v1566 = vld [vmem:[%s1563 + $0x8] sm:$0xf]
        %v1570 = vunpack.c.l.b16 %v1564
        %v1571 = vunpack.c.l.b16 %v1565
        %v1572 = vunpack.c.l.b16 %v1566
        %v1573 = vpack.c.b16 %v1571, %v1570
        %v1574 = vpack.c.b16 %v1572, %v1572
        %v1576 = vsel %vm1292, %v1278, 0
        %v1579 = vsel %vm1309, %v1574, 0
        %1581 = vmatprep.subr.bf16.mxu0 0
        %1582 = vmatpush1.bf16.msra.mxu0 %v1573
        %1583 = vmatprep.subr.bf16.mxu0 0
        %1584 = vmatpush1.bf16.msra.mxu0 %v1579
        %1585 = vmatprep.subr.bf16.mxu0 0
        %1586 = vmatpush1.bf16.msra.mxu0 0
        %1587 = vmatprep.subr.bf16.mxu0 0
        %1588 = vmatpush1.bf16.msra.mxu0 0
        %1589 = vmatprep.subr.bf16.mxu0 0
        %1590 = vmatpush1.bf16.msra.mxu0 0
        %1591 = vmatprep.subr.bf16.mxu0 0
        %1592 = vmatpush1.bf16.msra.mxu0 0
        %1593 = vmatprep.subr.bf16.mxu0 0
        %1594 = vmatpush1.bf16.msra.mxu0 0
        %1595 = vmatprep.subr.bf16.mxu0 0
        %1596 = vmatpush1.bf16.msra.mxu0 0
        %1597 = vmatprep.subr.bf16.mxu0 0
        %1598 = vmatpush1.bf16.msra.mxu0 0
        %1599 = vmatprep.subr.bf16.mxu0 0
        %1600 = vmatpush1.bf16.msra.mxu0 0
        %1601 = vmatprep.subr.bf16.mxu0 0
        %1602 = vmatpush1.bf16.msra.mxu0 0
        %1603 = vmatprep.subr.bf16.mxu0 0
        %1604 = vmatpush1.bf16.msra.mxu0 0
        %1605 = vmatprep.subr.bf16.mxu0 0
        %1606 = vmatpush1.bf16.msra.mxu0 0
        %1607 = vmatprep.subr.bf16.mxu0 0
        %1608 = vmatpush1.bf16.msra.mxu0 0
        %1609 = vmatprep.subr.bf16.mxu0 0
        %1610 = vmatpush1.bf16.msra.mxu0 0
        %1611 = vmatprep.subr.bf16.mxu0 0
        %1612 = vmatpush1.bf16.msra.mxu0 0
        %1613 = vmatprep.mubr.bf16.mxu0 0
        %1614 = vmatmul.mubr.bf16.gmra.mrb[0].mxu0 %v1297
        %v1615 = vpop.f32.mrb[0].mxu0
        %v1616 = vadd.f32 0.0, %v1615
        %v1617 = vpop.f32.mrb[0].mxu0
        %v1618 = vpop.f32.mrb[0].mxu0
        %v1619 = vadd.f32 0.0, %v1618
        %v1620 = vpop.f32.mrb[0].mxu0
        %1621 = vmatprep.mubr.bf16.mxu0 0
        %1622 = vmatmul.mubr.bf16.gmra.mrb[0].mxu0 %v1299
        %v1623 = vpop.f32.mrb[0].mxu0
        %v1624 = vadd.f32 0.0, %v1623
        %v1625 = vpop.f32.mrb[0].mxu0
        %v1626 = vpop.f32.mrb[0].mxu0
        %v1627 = vadd.f32 0.0, %v1626
        %v1628 = vpop.f32.mrb[0].mxu0
        %1629 = vmatprep.mubr.bf16.mxu0 0
        %1630 = vmatmul.mubr.bf16.gmra.mrb[0].mxu0 %v1301
        %v1631 = vpop.f32.mrb[0].mxu0
        %v1632 = vadd.f32 0.0, %v1631
        %v1633 = vpop.f32.mrb[0].mxu0
        %v1634 = vpop.f32.mrb[0].mxu0
        %v1635 = vadd.f32 0.0, %v1634
        %v1636 = vpop.f32.mrb[0].mxu0
        %1637 = vmatprep.mubr.bf16.mxu0 0
        %1638 = vmatmul.mubr.bf16.gmra.mrb[0].mxu0 %v1303
        %v1639 = vpop.f32.mrb[0].mxu0
        %v1640 = vadd.f32 0.0, %v1639
        %v1641 = vpop.f32.mrb[0].mxu0
        %v1642 = vpop.f32.mrb[0].mxu0
        %v1643 = vadd.f32 0.0, %v1642
        %v1644 = vpop.f32.mrb[0].mxu0
        %1645 = vmatprep.mubr.bf16.mxu0 0
        %1646 = vmatmul.mubr.bf16.gmra.mrb[0].mxu0 %v1305
        %v1647 = vpop.f32.mrb[0].mxu0
        %v1648 = vadd.f32 0.0, %v1647
        %v1649 = vpop.f32.mrb[0].mxu0
        %v1650 = vpop.f32.mrb[0].mxu0
        %v1651 = vadd.f32 0.0, %v1650
        %v1652 = vpop.f32.mrb[0].mxu0
        %1653 = vmatprep.mubr.bf16.mxu0 0
        %1654 = vmatmul.mubr.bf16.gmra.mrb[0].mxu0 %v1307
        %v1655 = vpop.f32.mrb[0].mxu0
        %v1656 = vadd.f32 0.0, %v1655
        %v1657 = vpop.f32.mrb[0].mxu0
        %v1658 = vpop.f32.mrb[0].mxu0
        %v1659 = vadd.f32 0.0, %v1658
        %v1660 = vpop.f32.mrb[0].mxu0
        %1661 = vmatprep.mubr.bf16.mxu0 0
        %1662 = vmatmul.mubr.bf16.gmra.mrb[0].mxu0 %v1445
        %v1663 = vpop.f32.mrb[0].mxu0
        %v1664 = vadd.f32 0.0, %v1663
        %v1665 = vpop.f32.mrb[0].mxu0
        %v1666 = vpop.f32.mrb[0].mxu0
        %v1667 = vadd.f32 0.0, %v1666
        %v1668 = vpop.f32.mrb[0].mxu0
        %1669 = vmatprep.mubr.bf16.mxu0 0
        %1670 = vmatmul.mubr.bf16.gmra.mrb[0].mxu0 %v1576
        %v1671 = vpop.f32.mrb[0].mxu0
        %v1672 = vadd.f32 0.0, %v1671
        %v1673 = vpop.f32.mrb[0].mxu0
        %v1674 = vpop.f32.mrb[0].mxu0
        %v1675 = vadd.f32 0.0, %v1674
        %v1676 = vpop.f32.mrb[0].mxu0
        %1677 = vdwg.mxu0
        %v1678 = vadd.f32 %v1547, %v1616
        %v1679 = vadd.f32 %v1548, %v1619
        %v1680 = vadd.f32 %v1549, %v1624
        %v1681 = vadd.f32 %v1550, %v1627
        %v1682 = vadd.f32 %v1551, %v1632
        %v1683 = vadd.f32 %v1552, %v1635
        %v1684 = vadd.f32 %v1553, %v1640
        %v1685 = vadd.f32 %v1554, %v1643
        %v1686 = vadd.f32 %v1555, %v1648
        %v1687 = vadd.f32 %v1556, %v1651
        %v1688 = vadd.f32 %v1557, %v1656
        %v1689 = vadd.f32 %v1558, %v1659
        %v1690 = vadd.f32 %v1559, %v1664
        %v1691 = vadd.f32 %v1560, %v1667
        %v1692 = vadd.f32 %v1561, %v1672
        %v1693 = vadd.f32 %v1562, %v1675
        %v1694 = vmax.f32 %v1678, 0.0
        %v1695 = vmax.f32 %v1679, 0.0
        %v1696 = vmax.f32 %v1680, 0.0
        %v1697 = vmax.f32 %v1681, 0.0
        %v1698 = vmax.f32 %v1682, 0.0
        %v1699 = vmax.f32 %v1683, 0.0
        %v1700 = vmax.f32 %v1684, 0.0
        %v1701 = vmax.f32 %v1685, 0.0
        %v1702 = vmax.f32 %v1686, 0.0
        %v1703 = vmax.f32 %v1687, 0.0
        %v1704 = vmax.f32 %v1688, 0.0
        %v1705 = vmax.f32 %v1689, 0.0
        %v1706 = vmax.f32 %v1690, 0.0
        %v1707 = vmax.f32 %v1691, 0.0
        %v1708 = vmax.f32 %v1692, 0.0
        %v1709 = vmax.f32 %v1693, 0.0
        %v1710 = vpack.c.bf16 %v1695, %v1694
        %v1711 = vpack.c.bf16 %v1697, %v1696
        %v1712 = vpack.c.bf16 %v1699, %v1698
        %v1713 = vpack.c.bf16 %v1701, %v1700
        %v1714 = vpack.c.bf16 %v1703, %v1702
        %v1715 = vpack.c.bf16 %v1705, %v1704
        %v1716 = vpack.c.bf16 %v1707, %v1706
        %v1717 = vpack.c.bf16 %v1709, %v1708
        %v1718 = vld [vmem:[#allocation11] sm:$0xf]
        %v1719 = vld [vmem:[#allocation16] sm:$0x1]
        %v1721 = vlaneseq
        %v1722 = vshrl.u32 %v1721, 7
        %v1723 = vsub.s32 0, %v1722
        %v1724 = vrot.slane %v1719, %v1723
        %v1727 = vsel %vm1237, %v1710, 0
        %v1730 = vsel %vm1237, %v1711, 0
        %v1733 = vsel %vm1237, %v1712, 0
        %v1736 = vsel %vm1237, %v1713, 0
        %v1739 = vsel %vm1237, %v1714, 0
        %v1742 = vsel %vm1237, %v1715, 0
        %v1745 = vsel %vm1237, %v1716, 0
        %v1748 = vsel %vm1237, %v1717, 0
        %v1751 = vsel %vm1309, %v1718, 0
        %1753 = vmatprep.subr.bf16.mxu0 0
        %1754 = vmatpush1.bf16.msra.mxu0 %v1751
        %1755 = vmatprep.subr.bf16.mxu0 0
        %1756 = vmatpush1.bf16.msra.mxu0 0
        %1757 = vmatprep.subr.bf16.mxu0 0
        %1758 = vmatpush1.bf16.msra.mxu0 0
        %1759 = vmatprep.subr.bf16.mxu0 0
        %1760 = vmatpush1.bf16.msra.mxu0 0
        %1761 = vmatprep.subr.bf16.mxu0 0
        %1762 = vmatpush1.bf16.msra.mxu0 0
        %1763 = vmatprep.subr.bf16.mxu0 0
        %1764 = vmatpush1.bf16.msra.mxu0 0
        %1765 = vmatprep.subr.bf16.mxu0 0
        %1766 = vmatpush1.bf16.msra.mxu0 0
        %1767 = vmatprep.subr.bf16.mxu0 0
        %1768 = vmatpush1.bf16.msra.mxu0 0
        %1769 = vmatprep.subr.bf16.mxu0 0
        %1770 = vmatpush1.bf16.msra.mxu0 0
        %1771 = vmatprep.subr.bf16.mxu0 0
        %1772 = vmatpush1.bf16.msra.mxu0 0
        %1773 = vmatprep.subr.bf16.mxu0 0
        %1774 = vmatpush1.bf16.msra.mxu0 0
        %1775 = vmatprep.subr.bf16.mxu0 0
        %1776 = vmatpush1.bf16.msra.mxu0 0
        %1777 = vmatprep.subr.bf16.mxu0 0
        %1778 = vmatpush1.bf16.msra.mxu0 0
        %1779 = vmatprep.subr.bf16.mxu0 0
        %1780 = vmatpush1.bf16.msra.mxu0 0
        %1781 = vmatprep.subr.bf16.mxu0 0
        %1782 = vmatpush1.bf16.msra.mxu0 0
        %1783 = vmatprep.subr.bf16.mxu0 0
        %1784 = vmatpush1.bf16.msra.mxu0 0
        %1785 = vmatprep.mubr.bf16.mxu0 0
        %1786 = vmatmul.mubr.bf16.gmra.mrb[0].mxu0 %v1727
        %v1787 = vpop.f32.mrb[0].mxu0
        %v1788 = vadd.f32 %v1724, %v1787
        %v1789 = vpop.f32.mrb[0].mxu0
        %v1790 = vpop.f32.mrb[0].mxu0
        %v1791 = vadd.f32 %v1724, %v1790
        %v1792 = vpop.f32.mrb[0].mxu0
        %1793 = vmatprep.mubr.bf16.mxu0 0
        %1794 = vmatmul.mubr.bf16.gmra.mrb[0].mxu0 %v1730
        %v1795 = vpop.f32.mrb[0].mxu0
        %v1796 = vadd.f32 %v1724, %v1795
        %v1797 = vpop.f32.mrb[0].mxu0
        %v1798 = vpop.f32.mrb[0].mxu0
        %v1799 = vadd.f32 %v1724, %v1798
        %v1800 = vpop.f32.mrb[0].mxu0
        %1801 = vmatprep.mubr.bf16.mxu0 0
        %1802 = vmatmul.mubr.bf16.gmra.mrb[0].mxu0 %v1733
        %v1803 = vpop.f32.mrb[0].mxu0
        %v1804 = vadd.f32 %v1724, %v1803
        %v1805 = vpop.f32.mrb[0].mxu0
        %v1806 = vpop.f32.mrb[0].mxu0
        %v1807 = vadd.f32 %v1724, %v1806
        %v1808 = vpop.f32.mrb[0].mxu0
        %1809 = vmatprep.mubr.bf16.mxu0 0
        %1810 = vmatmul.mubr.bf16.gmra.mrb[0].mxu0 %v1736
        %v1811 = vpop.f32.mrb[0].mxu0
        %v1812 = vadd.f32 %v1724, %v1811
        %v1813 = vpop.f32.mrb[0].mxu0
        %v1814 = vpop.f32.mrb[0].mxu0
        %v1815 = vadd.f32 %v1724, %v1814
        %v1816 = vpop.f32.mrb[0].mxu0
        %1817 = vmatprep.mubr.bf16.mxu0 0
        %1818 = vmatmul.mubr.bf16.gmra.mrb[0].mxu0 %v1739
        %v1819 = vpop.f32.mrb[0].mxu0
        %v1820 = vadd.f32 %v1724, %v1819
        %v1821 = vpop.f32.mrb[0].mxu0
        %v1822 = vpop.f32.mrb[0].mxu0
        %v1823 = vadd.f32 %v1724, %v1822
        %v1824 = vpop.f32.mrb[0].mxu0
        %1825 = vmatprep.mubr.bf16.mxu0 0
        %1826 = vmatmul.mubr.bf16.gmra.mrb[0].mxu0 %v1742
        %v1827 = vpop.f32.mrb[0].mxu0
        %v1828 = vadd.f32 %v1724, %v1827
        %v1829 = vpop.f32.mrb[0].mxu0
        %v1830 = vpop.f32.mrb[0].mxu0
        %v1831 = vadd.f32 %v1724, %v1830
        %v1832 = vpop.f32.mrb[0].mxu0
        %1833 = vmatprep.mubr.bf16.mxu0 0
        %1834 = vmatmul.mubr.bf16.gmra.mrb[0].mxu0 %v1745
        %v1835 = vpop.f32.mrb[0].mxu0
        %v1836 = vadd.f32 %v1724, %v1835
        %v1837 = vpop.f32.mrb[0].mxu0
        %v1838 = vpop.f32.mrb[0].mxu0
        %v1839 = vadd.f32 %v1724, %v1838
        %v1840 = vpop.f32.mrb[0].mxu0
        %1841 = vmatprep.mubr.bf16.mxu0 0
        %1842 = vmatmul.mubr.bf16.gmra.mrb[0].mxu0 %v1748
        %v1843 = vpop.f32.mrb[0].mxu0
        %v1844 = vadd.f32 %v1724, %v1843
        %v1845 = vpop.f32.mrb[0].mxu0
        %v1846 = vpop.f32.mrb[0].mxu0
        %v1847 = vadd.f32 %v1724, %v1846
        %v1848 = vpop.f32.mrb[0].mxu0
        %1849 = vdwg.mxu0
        %v1850 = vunpack.c.l.bf16 %v574
        %v1851 = vunpack.c.l.bf16 %v575
        %v1852 = vunpack.c.l.bf16 %v576
        %v1853 = vunpack.c.l.bf16 %v577
        %v1854 = vunpack.c.l.bf16 %v578
        %v1855 = vunpack.c.l.bf16 %v579
        %v1856 = vunpack.c.l.bf16 %v580
        %v1857 = vunpack.c.l.bf16 %v581
        %v1858 = vunpack.c.l.bf16 %v582
        %v1859 = vunpack.c.l.bf16 %v583
        %v1860 = vunpack.c.l.bf16 %v584
        %v1861 = vunpack.c.l.bf16 %v585
        %v1862 = vunpack.c.l.bf16 %v586
        %v1863 = vunpack.c.l.bf16 %v587
        %v1864 = vunpack.c.l.bf16 %v588
        %v1865 = vunpack.c.l.bf16 %v589
        %v1866 = vadd.f32 %v1788, %v1850
        %v1867 = vadd.f32 %v1791, %v1851
        %v1868 = vadd.f32 %v1796, %v1852
        %v1869 = vadd.f32 %v1799, %v1853
        %v1870 = vadd.f32 %v1804, %v1854
        %v1871 = vadd.f32 %v1807, %v1855
        %v1872 = vadd.f32 %v1812, %v1856
        %v1873 = vadd.f32 %v1815, %v1857
        %v1874 = vadd.f32 %v1820, %v1858
        %v1875 = vadd.f32 %v1823, %v1859
        %v1876 = vadd.f32 %v1828, %v1860
        %v1877 = vadd.f32 %v1831, %v1861
        %v1878 = vadd.f32 %v1836, %v1862
        %v1879 = vadd.f32 %v1839, %v1863
        %v1880 = vadd.f32 %v1844, %v1864
        %v1881 = vadd.f32 %v1847, %v1865
        %v1882 = vmax.f32 %v1866, 0.0
        %v1883 = vmax.f32 %v1867, 0.0
        %v1884 = vmax.f32 %v1868, 0.0
        %v1885 = vmax.f32 %v1869, 0.0
        %v1886 = vmax.f32 %v1870, 0.0
        %v1887 = vmax.f32 %v1871, 0.0
        %v1888 = vmax.f32 %v1872, 0.0
        %v1889 = vmax.f32 %v1873, 0.0
        %v1890 = vmax.f32 %v1874, 0.0
        %v1891 = vmax.f32 %v1875, 0.0
        %v1892 = vmax.f32 %v1876, 0.0
        %v1893 = vmax.f32 %v1877, 0.0
        %v1894 = vmax.f32 %v1878, 0.0
        %v1895 = vmax.f32 %v1879, 0.0
        %v1896 = vmax.f32 %v1880, 0.0
        %v1897 = vmax.f32 %v1881, 0.0
        %v1898 = vpack.c.bf16 %v1883, %v1882
        %v1899 = vpack.c.bf16 %v1885, %v1884
        %v1900 = vpack.c.bf16 %v1887, %v1886
        %v1901 = vpack.c.bf16 %v1889, %v1888
        %v1902 = vpack.c.bf16 %v1891, %v1890
        %v1903 = vpack.c.bf16 %v1893, %v1892
        %v1904 = vpack.c.bf16 %v1895, %v1894
        %v1905 = vpack.c.bf16 %v1897, %v1896
        %v1914 = vunpack.c.l.b16 %v1898
        %v1915 = vunpack.c.h.b16 %v1898
        %v1916 = vunpack.c.l.b16 %v1899
        %v1917 = vunpack.c.h.b16 %v1899
        %v1918 = vunpack.c.l.b16 %v1900
        %v1919 = vunpack.c.h.b16 %v1900
        %v1920 = vunpack.c.l.b16 %v1901
        %v1921 = vunpack.c.h.b16 %v1901
        %v1922 = vunpack.c.l.b16 %v1902
        %v1923 = vunpack.c.h.b16 %v1902
        %v1924 = vunpack.c.l.b16 %v1903
        %v1925 = vunpack.c.h.b16 %v1903
        %v1926 = vunpack.c.l.b16 %v1904
        %v1927 = vunpack.c.h.b16 %v1904
        %v1928 = vunpack.c.l.b16 %v1905
        %v1929 = vunpack.c.h.b16 %v1905
        %v1930 = vpack.c.b16 %v1914, %v1914
        %v1931 = vpack.c.b16 %v1915, %v1915
        %v1932 = vpack.c.b16 %v1916, %v1916
        %v1933 = vpack.c.b16 %v1917, %v1917
        %v1934 = vpack.c.b16 %v1918, %v1918
        %v1935 = vpack.c.b16 %v1919, %v1919
        %v1936 = vpack.c.b16 %v1920, %v1920
        %v1937 = vpack.c.b16 %v1921, %v1921
        %v1938 = vpack.c.b16 %v1922, %v1922
        %v1939 = vpack.c.b16 %v1923, %v1923
        %v1940 = vpack.c.b16 %v1924, %v1924
        %v1941 = vpack.c.b16 %v1925, %v1925
        %v1942 = vpack.c.b16 %v1926, %v1926
        %v1943 = vpack.c.b16 %v1927, %v1927
        %v1944 = vpack.c.b16 %v1928, %v1928
        %v1945 = vpack.c.b16 %v1929, %v1929
        %vm1962 = vcmask 257024
        %1963 = vst.msk [vmem:[%s557] sm:$0xf] %vm1962, %v1930
        %1964 = vst.msk [vmem:[%s557 + $0x4] sm:$0xf] %vm1962, %v1931
        %1965 = vst.msk [vmem:[%s557 + $0x8] sm:$0xf] %vm1962, %v1932
        %1966 = vst.msk [vmem:[%s557 + $0xc] sm:$0xf] %vm1962, %v1933
        %1967 = vst.msk [vmem:[%s557 + $0x10] sm:$0xf] %vm1962, %v1934
        %1968 = vst.msk [vmem:[%s557 + $0x14] sm:$0xf] %vm1962, %v1935
        %1969 = vst.msk [vmem:[%s557 + $0x18] sm:$0xf] %vm1962, %v1936
        %1970 = vst.msk [vmem:[%s557 + $0x1c] sm:$0xf] %vm1962, %v1937
        %1971 = vst.msk [vmem:[%s557 + $0x20] sm:$0xf] %vm1962, %v1938
        %1972 = vst.msk [vmem:[%s557 + $0x24] sm:$0xf] %vm1962, %v1939
        %1973 = vst.msk [vmem:[%s557 + $0x28] sm:$0xf] %vm1962, %v1940
        %1974 = vst.msk [vmem:[%s557 + $0x2c] sm:$0xf] %vm1962, %v1941
        %1975 = vst.msk [vmem:[%s557 + $0x30] sm:$0xf] %vm1962, %v1942
        %1976 = vst.msk [vmem:[%s557 + $0x34] sm:$0xf] %vm1962, %v1943
        %1977 = vst.msk [vmem:[%s557 + $0x38] sm:$0xf] %vm1962, %v1944
        %1978 = vst.msk [vmem:[%s557 + $0x3c] sm:$0xf] %vm1962, %v1945
        %s1979 = sand.u32 %s280, 1
        %s1980 = scalar_lea.sflag [#allocation4], %s1979
        %s1981 = sand.u32 %s280, 1
        %s1982 = smul.addr %s1981, 64
        %s1983 = scalar_lea.vmem [#allocation17], %s1982
        // Predicated region
        $region93: #{tpu_custom_call.1} parent=55 // pred_check
          %p1984 = pneg %p290
        $region94: #{tpu_custom_call.1} parent=55 // pred_check_branch
          %1986 = sbr.rel (%p1984) target = $region96
        $region95: #{tpu_custom_call.1} parent=55 // pred_region
          %s1987 = smul.u32 8, %s37
          %s1989 = ssub.s32 1024, 1024
          %1990 = vsyncadd %s1980, %s1989
          %s1991 = smul.addr %s1987, 2
          %s1992 = smul.addr %s36, 32
          %s1993 = sadd.s32 %s1991, %s1992
          %s1994 = smul.addr %s1993, 64
          %s1995 = scalar_lea.hbm %s9, %s1994
          %s1996 = sshll.u32 %s1983, 4
          %s1997 = int_to_ptr.vmem [resolvable:$true] %s1996
          %2002 = dma.vmem_to_hbm [thread:$0]  %s1997, 1024, %s1995, %s1980, 64, 64, 4
        $region96: #{tpu_custom_call.1} parent=55 // pred_fallthru
          _
      $region56: #{tpu_custom_call.1} parent=5 // pred_fallthru
        _
      %p2003 = scmp.le.s32.totalorder 2, %s27
      // Predicated region
      $region97: #{tpu_custom_call.1} parent=5 // pred_check
        %p2004 = pneg %p2003
      $region98: #{tpu_custom_call.1} parent=5 // pred_check_branch
        %2006 = sbr.rel (%p2004) target = $region100
      $region99: #{tpu_custom_call.1} parent=5 // pred_region
        %s2007 = ssub.s32 %s27, 2
        // Predicated region
        $region101: #{tpu_custom_call.1} parent=99 // pred_check
          %p2008 = pneg %p296
        $region102: #{tpu_custom_call.1} parent=99 // pred_check_branch
          %2010 = sbr.rel (%p2008) target = $region104
        $region103: #{tpu_custom_call.1} parent=99 // pred_region
          %s2011 = sand.u32 %s281, 1
          %s2012 = scalar_lea.sflag [#allocation4], %s2011
          %s2013 = sand.u32 %s281, 1
          %s2014 = smul.addr %s2013, 64
          %s2015 = scalar_lea.vmem [#allocation17], %s2014
          %2016 = dma.done %s2012, 1024
        $region104: #{tpu_custom_call.1} parent=99 // pred_fallthru
          _
      $region100: #{tpu_custom_call.1} parent=5 // pred_fallthru
        _
    $region6: #{tpu_custom_call.1} parent=1 // loop_footer
      %s31 = sadd.s32 1, %s27
    $region7: #{tpu_custom_call.1} parent=1 // loop_footer_branch
      %26 = sbr.rel target = $region3
    $region8: #{tpu_custom_call.1} parent=1 // loop_exit
      _
    %2017 = vsyncpa [#allocation3], 1
    %s2018 = scalar_lea.sflag [#allocation3], 1
    %2019 = vsyncpa %s2018, 1
    %2020 = vsyncpa [#allocation6], 1
    %s2021 = scalar_lea.sflag [#allocation6], 1
    %2022 = vsyncpa %s2021, 1
    %2023 = vsyncpa [#allocation9], 1
    %2024 = vsyncpa [#allocation12], 1
    %2025 = vsyncpa [#allocation15], 1
    %2026 = vsyncpa [#allocation4], 1
    %s2027 = scalar_lea.sflag [#allocation4], 1
    %2028 = vsyncpa %s2027, 1

</llo_original>
